<compile_context>
chip_gen: v6e
topology: v6e:2x2x1
jax: 0.10.0
libtpu: 0.0.40
codegen_flags: <defaults>
</compile_context>

<pallas_src>
import jax
import jax.numpy as jnp
from jax.experimental import pallas as pl
from jax.experimental.pallas import tpu as pltpu


def rnn_classifier_forward(x, params, *, tc_max=32):
    """x: (B, T) int token ids (or (T,), mirroring PyTorch unsqueeze(0)).
    Returns (B, output_dim) float32 logits == fc(hidden[-1])."""
    if x.ndim == 1:
        x = x[None, :]
    x = x.astype(jnp.int32)

    emb = params["embedding"].astype(jnp.float32)               # (V, E)
    w_ih = params["w_ih"].astype(jnp.float32)                   # (4H, E)
    w_hh = params["w_hh"].astype(jnp.float32)                   # (4H, H)
    b = (params["b_ih"] + params["b_hh"]).astype(jnp.float32)   # (4H,)
    w_fc = params["w_fc"].astype(jnp.float32)                   # (O, H)
    b_fc = params["b_fc"].astype(jnp.float32)                   # (O,)

    B, T = x.shape
    V = emb.shape[0]
    H = w_hh.shape[1]
    G = 4 * H
    O = w_fc.shape[0]

    # Fold embedding + input projection + combined bias into one (V, 4H) table.
    proj_table = emb @ w_ih.T + b                                # (V, 4H)

    # Padding: batch to a full f32 sublane, vocab / output dim to full lanes.
    Bp = max(8, ((B + 7) // 8) * 8)
    Vp = max(128, ((V + 127) // 128) * 128)
    Op = max(128, ((O + 127) // 128) * 128)

    # Time chunking: Tc timesteps per grid step, statically unrolled in-kernel.
    Tc = min(T, tc_max)
    n_chunks = pl.cdiv(T, Tc)
    Tp = n_chunks * Tc

    proj_p = jnp.pad(proj_table, ((0, Vp - V), (0, 0)))          # (Vp, 4H)
    whh_t = w_hh.T                                               # (H, 4H)
    wfc_p = jnp.pad(w_fc.T, ((0, 0), (0, Op - O)))               # (H, Op)
    bfc_p = jnp.pad(b_fc, (0, Op - O))[None, :]                  # (1, Op)

    # Token ids, time-major; pad ONLY the tiny id tensor (id 0 for pad slots).
    # Trailing size-1 axis so a per-step read is already a (Bp, 1) tile.
    ids = jnp.pad(x.T, ((0, Tp - T), (0, Bp - B)))[:, :, None]   # (Tp, Bp, 1)

    def kernel(ids_ref, proj_ref, whh_ref, wfc_ref, bfc_ref, out_ref,
               h_ref, c_ref):
        chunk = pl.program_id(0)

        @pl.when(chunk == 0)
        def _():
            h_ref[...] = jnp.zeros_like(h_ref)
            c_ref[...] = jnp.zeros_like(c_ref)

        proj = proj_ref[...]                                     # (Vp, 4H)
        whh = whh_ref[...]                                       # (H, 4H)
        lane_iota = jax.lax.broadcasted_iota(jnp.int32, (Bp, Vp), 1)

        h = h_ref[...]
        c = c_ref[...]
        for tt in range(Tc):  # static unroll (Tc <= tc_max)
            # In-kernel embedding+input-projection gather: one-hot @ table.
            onehot = (ids_ref[tt] == lane_iota).astype(jnp.float32)   # (Bp, Vp)
            gates = jnp.dot(onehot, proj, preferred_element_type=jnp.float32)
            gates = gates + jnp.dot(h, whh, preferred_element_type=jnp.float32)

            # PyTorch LSTM gate order: i, f, g, o.
            i_g = jax.nn.sigmoid(gates[:, 0 * H:1 * H])
            f_g = jax.nn.sigmoid(gates[:, 1 * H:2 * H])
            g_g = jnp.tanh(gates[:, 2 * H:3 * H])
            o_g = jax.nn.sigmoid(gates[:, 3 * H:4 * H])

            c_new = f_g * c + i_g * g_g
            h_new = o_g * jnp.tanh(c_new)

            if Tp == T:                      # static: no time padding present
                h, c = h_new, c_new
            else:                            # mask padded timesteps in last chunk
                valid = (chunk * Tc + tt) < T
                h = jnp.where(valid, h_new, h)
                c = jnp.where(valid, c_new, c)

        h_ref[...] = h
        c_ref[...] = c

        @pl.when(chunk == pl.num_programs(0) - 1)
        def _():
            out_ref[...] = (
                jnp.dot(h, wfc_ref[...], preferred_element_type=jnp.float32)
                + bfc_ref[...]
            )

    cost = pl.CostEstimate(
        flops=Tp * (2 * Bp * Vp * G + 2 * Bp * H * G) + 2 * Bp * H * Op,
        transcendentals=Tp * Bp * (G + H),
        bytes_accessed=4 * (ids.size + proj_p.size + whh_t.size + wfc_p.size
                            + bfc_p.size + Bp * Op),
    )

    out_padded = pl.pallas_call(
        kernel,
        out_shape=jax.ShapeDtypeStruct((Bp, Op), jnp.float32),
        grid_spec=pltpu.PrefetchScalarGridSpec(
            num_scalar_prefetch=0,
            grid=(n_chunks,),
            in_specs=[
                # streamed per-chunk token ids (tiny)
                pl.BlockSpec((Tc, Bp, 1), lambda ci: (ci, 0, 0)),
                # resident folded embedding+input-projection table
                pl.BlockSpec((Vp, G), lambda ci: (0, 0)),
                # resident recurrent weight, FC weight, FC bias
                pl.BlockSpec((H, G), lambda ci: (0, 0)),
                pl.BlockSpec((H, Op), lambda ci: (0, 0)),
                pl.BlockSpec((1, Op), lambda ci: (0, 0)),
            ],
            out_specs=pl.BlockSpec((Bp, Op), lambda ci: (0, 0)),  # resident output
            scratch_shapes=[
                pltpu.VMEM((Bp, H), jnp.float32),  # h carry
                pltpu.VMEM((Bp, H), jnp.float32),  # c carry
            ],
        ),
        compiler_params=pltpu.CompilerParams(
            dimension_semantics=("arbitrary",),   # time chunks are serial
        ),
        cost_estimate=cost,
    )(ids, proj_p, whh_t, wfc_p, bfc_p)

    return out_padded[:B, :O]


def reference_forward(x, params):
    """Pure-JAX reference mirroring the PyTorch module (un-fused form)."""
    if x.ndim == 1:
        x = x[None, :]
    emb = jnp.take(params["embedding"], x, axis=0).astype(jnp.float32)  # (B, T, E)
    H = params["w_hh"].shape[1]
    wih_t = params["w_ih"].T
    whh_t = params["w_hh"].T
    b = params["b_ih"] + params["b_hh"]
    B, T, _ = emb.shape
    h = jnp.zeros((B, H), jnp.float32)
    c = jnp.zeros((B, H), jnp.float32)
    for t in range(T):
        gates = emb[:, t, :] @ wih_t + h @ whh_t + b
        i_g = jax.nn.sigmoid(gates[:, 0 * H:1 * H])
        f_g = jax.nn.sigmoid(gates[:, 1 * H:2 * H])
        g_g = jnp.tanh(gates[:, 2 * H:3 * H])
        o_g = jax.nn.sigmoid(gates[:, 3 * H:4 * H])
        c = f_g * c + i_g * g_g
        h = o_g * jnp.tanh(c)
    return h @ params["w_fc"].T + params["b_fc"]


def init_params(key, vocab_size, embed_dim, hidden_dim, output_dim):
    ks = jax.random.split(key, 7)
    s = 1.0 / jnp.sqrt(hidden_dim)
    return {
        "embedding": jax.random.normal(ks[0], (vocab_size, embed_dim), jnp.float32),
        "w_ih": jax.random.uniform(ks[1], (4 * hidden_dim, embed_dim), jnp.float32, -s, s),
        "w_hh": jax.random.uniform(ks[2], (4 * hidden_dim, hidden_dim), jnp.float32, -s, s),
        "b_ih": jax.random.uniform(ks[3], (4 * hidden_dim,), jnp.float32, -s, s),
        "b_hh": jax.random.uniform(ks[4], (4 * hidden_dim,), jnp.float32, -s, s),
        "w_fc": jax.random.uniform(ks[5], (output_dim, hidden_dim), jnp.float32, -s, s),
        "b_fc": jax.random.uniform(ks[6], (output_dim,), jnp.float32, -s, s),
    }


if __name__ == "__main__":
    # Small shapes consistent with the module: vocab=27 chars, seq=8, hidden=32.
    VOCAB, EMBED, HIDDEN, OUT = 27, 32, 32, 2
    B, T = 2, 8

    key = jax.random.PRNGKey(0)
    pkey, xkey = jax.random.split(key)
    params = init_params(pkey, VOCAB, EMBED, HIDDEN, OUT)
    x = jax.random.randint(xkey, (B, T), 0, VOCAB, dtype=jnp.int32)

    logits = rnn_classifier_forward(x, params)
    logits = jax.block_until_ready(logits)

    ref = reference_forward(x, params)
    assert logits.shape == (B, OUT), logits.shape
    assert jnp.allclose(logits, ref, atol=2e-4, rtol=2e-4), (logits, ref)

    print("KERNEL_OK")
</pallas_src>

<mosaic_0001>
module attributes {stable_mosaic.version = 11 : i64} {
  func.func @kernel(%arg0: i32, %arg1: memref<8x8x1xi32, #tpu.memory_space<vmem>>, %arg2: memref<128x128xf32, #tpu.memory_space<vmem>>, %arg3: memref<32x128xf32, #tpu.memory_space<vmem>>, %arg4: memref<32x128xf32, #tpu.memory_space<vmem>>, %arg5: memref<1x128xf32, #tpu.memory_space<vmem>>, %arg6: memref<8x128xf32, #tpu.memory_space<vmem>>, %arg7: memref<8x32xf32, #tpu.memory_space<vmem>>, %arg8: memref<8x32xf32, #tpu.memory_space<vmem>>) attributes {dimension_semantics = [#tpu.dimension_semantics<arbitrary>], iteration_bounds = array<i64: 1>, scalar_prefetch = 0 : i64, scratch_operands = 2 : i64, tpu.core_type = #tpu.core_type<tc>, window_params = [{transform_indices = @transform_0, window_bounds = array<i64: 8, 8, 1>}, {pipeline_mode = #tpu.pipeline_mode<synchronous>, transform_indices = @transform_1, window_bounds = array<i64: 128, 128>}, {pipeline_mode = #tpu.pipeline_mode<synchronous>, transform_indices = @transform_2, window_bounds = array<i64: 32, 128>}, {pipeline_mode = #tpu.pipeline_mode<synchronous>, transform_indices = @transform_3, window_bounds = array<i64: 32, 128>}, {pipeline_mode = #tpu.pipeline_mode<synchronous>, transform_indices = @transform_4, window_bounds = array<i64: 1, 128>}, {pipeline_mode = #tpu.pipeline_mode<synchronous>, transform_indices = @transform_5, window_bounds = array<i64: 8, 128>}]} {
    %c0_i32 = arith.constant 0 : i32
    %0 = arith.cmpi eq, %arg0, %c0_i32 : i32
    %1 = arith.extui %0 : i1 to i32
    %c0_i32_0 = arith.constant 0 : i32
    %2 = arith.cmpi ne, %1, %c0_i32_0 : i32
    scf.if %2 {
      %cst_70 = arith.constant 0.000000e+00 : f32
      %285 = vector.broadcast %cst_70 : f32 to vector<8x32xf32>
      %c0_71 = arith.constant 0 : index
      %c0_72 = arith.constant 0 : index
      %286 = vector.load %arg7[%c0_71, %c0_72] : memref<8x32xf32, #tpu.memory_space<vmem>>, vector<8x32xf32>
      tpu.vector_store %arg7[%c0_71, %c0_72], %285 {strides = array<i32>} : memref<8x32xf32, #tpu.memory_space<vmem>>, vector<8x32xf32>,
      %cst_73 = arith.constant 0.000000e+00 : f32
      %287 = vector.broadcast %cst_73 : f32 to vector<8x32xf32>
      %c0_74 = arith.constant 0 : index
      %c0_75 = arith.constant 0 : index
      %288 = vector.load %arg8[%c0_74, %c0_75] : memref<8x32xf32, #tpu.memory_space<vmem>>, vector<8x32xf32>
      tpu.vector_store %arg8[%c0_74, %c0_75], %287 {strides = array<i32>} : memref<8x32xf32, #tpu.memory_space<vmem>>, vector<8x32xf32>,
    } else {
    }
    %c0 = arith.constant 0 : index
    %c0_1 = arith.constant 0 : index
    %3 = vector.load %arg2[%c0, %c0_1] : memref<128x128xf32, #tpu.memory_space<vmem>>, vector<128x128xf32>
    %c0_2 = arith.constant 0 : index
    %c0_3 = arith.constant 0 : index
    %4 = vector.load %arg3[%c0_2, %c0_3] : memref<32x128xf32, #tpu.memory_space<vmem>>, vector<32x128xf32>
    %5 = tpu.iota {dimensions = array<i32: 1>} : vector<8x128xi32>
    %c0_4 = arith.constant 0 : index
    %c0_5 = arith.constant 0 : index
    %6 = vector.load %arg7[%c0_4, %c0_5] : memref<8x32xf32, #tpu.memory_space<vmem>>, vector<8x32xf32>
    %c0_6 = arith.constant 0 : index
    %c0_7 = arith.constant 0 : index
    %7 = vector.load %arg8[%c0_6, %c0_7] : memref<8x32xf32, #tpu.memory_space<vmem>>, vector<8x32xf32>
    %c0_8 = arith.constant 0 : index
    %c0_9 = arith.constant 0 : index
    %c0_10 = arith.constant 0 : index
    %8 = vector.load %arg1[%c0_8, %c0_9, %c0_10] : memref<8x8x1xi32, #tpu.memory_space<vmem>>, vector<1x8x1xi32>
    %9 = vector.shape_cast %8 : vector<1x8x1xi32> to vector<8x1xi32>
    %10 = vector.broadcast %9 : vector<8x1xi32> to vector<8x128xi32>
    %11 = arith.cmpi eq, %10, %5 : vector<8x128xi32>
    %12 = arith.extui %11 : vector<8x128xi1> to vector<8x128xi32>
    %13 = arith.sitofp %12 : vector<8x128xi32> to vector<8x128xf32>
    %cst = arith.constant dense<0.000000e+00> : vector<8x128xf32>
    %14 = tpu.matmul %13, %3, %cst {dimension_numbers = #tpu.dot_dimension_numbers<[1], [0], [0], [1], [0, 0, 1, 1], [], []>} : vector<8x128xf32>, vector<128x128xf32>, vector<8x128xf32> -> vector<8x128xf32>
    %cst_11 = arith.constant dense<0.000000e+00> : vector<8x128xf32>
    %15 = tpu.matmul %6, %4, %cst_11 {dimension_numbers = #tpu.dot_dimension_numbers<[1], [0], [0], [1], [0, 0, 1, 1], [], []>} : vector<8x32xf32>, vector<32x128xf32>, vector<8x128xf32> -> vector<8x128xf32>
    %16 = arith.addf %14, %15 : vector<8x128xf32>
    %17 = vector.extract_strided_slice %16 {offsets = [0, 0], sizes = [8, 32], strides = [1, 1]} : vector<8x128xf32> to vector<8x32xf32>
    %18 = arith.negf %17 : vector<8x32xf32>
    %19 = math.exp %18 : vector<8x32xf32>
    %cst_12 = arith.constant 1.000000e+00 : f32
    %20 = vector.broadcast %cst_12 : f32 to vector<8x32xf32>
    %21 = arith.addf %20, %19 : vector<8x32xf32>
    %22 = arith.divf %20, %21 : vector<8x32xf32>
    %23 = vector.extract_strided_slice %16 {offsets = [0, 32], sizes = [8, 32], strides = [1, 1]} : vector<8x128xf32> to vector<8x32xf32>
    %24 = arith.negf %23 : vector<8x32xf32>
    %25 = math.exp %24 : vector<8x32xf32>
    %cst_13 = arith.constant 1.000000e+00 : f32
    %26 = vector.broadcast %cst_13 : f32 to vector<8x32xf32>
    %27 = arith.addf %26, %25 : vector<8x32xf32>
    %28 = arith.divf %26, %27 : vector<8x32xf32>
    %29 = vector.extract_strided_slice %16 {offsets = [0, 64], sizes = [8, 32], strides = [1, 1]} : vector<8x128xf32> to vector<8x32xf32>
    %30 = math.tanh %29 : vector<8x32xf32>
    %31 = vector.extract_strided_slice %16 {offsets = [0, 96], sizes = [8, 32], strides = [1, 1]} : vector<8x128xf32> to vector<8x32xf32>
    %32 = arith.negf %31 : vector<8x32xf32>
    %33 = math.exp %32 : vector<8x32xf32>
    %cst_14 = arith.constant 1.000000e+00 : f32
    %34 = vector.broadcast %cst_14 : f32 to vector<8x32xf32>
    %35 = arith.addf %34, %33 : vector<8x32xf32>
    %36 = arith.divf %34, %35 : vector<8x32xf32>
    %37 = arith.mulf %28, %7 : vector<8x32xf32>
    %38 = arith.mulf %22, %30 : vector<8x32xf32>
    %39 = arith.addf %37, %38 : vector<8x32xf32>
    %40 = math.tanh %39 : vector<8x32xf32>
    %41 = arith.mulf %36, %40 : vector<8x32xf32>
    %c1 = arith.constant 1 : index
    %c0_15 = arith.constant 0 : index
    %c0_16 = arith.constant 0 : index
    %42 = vector.load %arg1[%c1, %c0_15, %c0_16] : memref<8x8x1xi32, #tpu.memory_space<vmem>>, vector<1x8x1xi32>
    %43 = vector.shape_cast %42 : vector<1x8x1xi32> to vector<8x1xi32>
    %44 = vector.broadcast %43 : vector<8x1xi32> to vector<8x128xi32>
    %45 = arith.cmpi eq, %44, %5 : vector<8x128xi32>
    %46 = arith.extui %45 : vector<8x128xi1> to vector<8x128xi32>
    %47 = arith.sitofp %46 : vector<8x128xi32> to vector<8x128xf32>
    %cst_17 = arith.constant dense<0.000000e+00> : vector<8x128xf32>
    %48 = tpu.matmul %47, %3, %cst_17 {dimension_numbers = #tpu.dot_dimension_numbers<[1], [0], [0], [1], [0, 0, 1, 1], [], []>} : vector<8x128xf32>, vector<128x128xf32>, vector<8x128xf32> -> vector<8x128xf32>
    %cst_18 = arith.constant dense<0.000000e+00> : vector<8x128xf32>
    %49 = tpu.matmul %41, %4, %cst_18 {dimension_numbers = #tpu.dot_dimension_numbers<[1], [0], [0], [1], [0, 0, 1, 1], [], []>} : vector<8x32xf32>, vector<32x128xf32>, vector<8x128xf32> -> vector<8x128xf32>
    %50 = arith.addf %48, %49 : vector<8x128xf32>
    %51 = vector.extract_strided_slice %50 {offsets = [0, 0], sizes = [8, 32], strides = [1, 1]} : vector<8x128xf32> to vector<8x32xf32>
    %52 = arith.negf %51 : vector<8x32xf32>
    %53 = math.exp %52 : vector<8x32xf32>
    %cst_19 = arith.constant 1.000000e+00 : f32
    %54 = vector.broadcast %cst_19 : f32 to vector<8x32xf32>
    %55 = arith.addf %54, %53 : vector<8x32xf32>
    %56 = arith.divf %54, %55 : vector<8x32xf32>
    %57 = vector.extract_strided_slice %50 {offsets = [0, 32], sizes = [8, 32], strides = [1, 1]} : vector<8x128xf32> to vector<8x32xf32>
    %58 = arith.negf %57 : vector<8x32xf32>
    %59 = math.exp %58 : vector<8x32xf32>
    %cst_20 = arith.constant 1.000000e+00 : f32
    %60 = vector.broadcast %cst_20 : f32 to vector<8x32xf32>
    %61 = arith.addf %60, %59 : vector<8x32xf32>
    %62 = arith.divf %60, %61 : vector<8x32xf32>
    %63 = vector.extract_strided_slice %50 {offsets = [0, 64], sizes = [8, 32], strides = [1, 1]} : vector<8x128xf32> to vector<8x32xf32>
    %64 = math.tanh %63 : vector<8x32xf32>
    %65 = vector.extract_strided_slice %50 {offsets = [0, 96], sizes = [8, 32], strides = [1, 1]} : vector<8x128xf32> to vector<8x32xf32>
    %66 = arith.negf %65 : vector<8x32xf32>
    %67 = math.exp %66 : vector<8x32xf32>
    %cst_21 = arith.constant 1.000000e+00 : f32
    %68 = vector.broadcast %cst_21 : f32 to vector<8x32xf32>
    %69 = arith.addf %68, %67 : vector<8x32xf32>
    %70 = arith.divf %68, %69 : vector<8x32xf32>
    %71 = arith.mulf %62, %39 : vector<8x32xf32>
    %72 = arith.mulf %56, %64 : vector<8x32xf32>
    %73 = arith.addf %71, %72 : vector<8x32xf32>
    %74 = math.tanh %73 : vector<8x32xf32>
    %75 = arith.mulf %70, %74 : vector<8x32xf32>
    %c2 = arith.constant 2 : index
    %c0_22 = arith.constant 0 : index
    %c0_23 = arith.constant 0 : index
    %76 = vector.load %arg1[%c2, %c0_22, %c0_23] : memref<8x8x1xi32, #tpu.memory_space<vmem>>, vector<1x8x1xi32>
    %77 = vector.shape_cast %76 : vector<1x8x1xi32> to vector<8x1xi32>
    %78 = vector.broadcast %77 : vector<8x1xi32> to vector<8x128xi32>
    %79 = arith.cmpi eq, %78, %5 : vector<8x128xi32>
    %80 = arith.extui %79 : vector<8x128xi1> to vector<8x128xi32>
    %81 = arith.sitofp %80 : vector<8x128xi32> to vector<8x128xf32>
    %cst_24 = arith.constant dense<0.000000e+00> : vector<8x128xf32>
    %82 = tpu.matmul %81, %3, %cst_24 {dimension_numbers = #tpu.dot_dimension_numbers<[1], [0], [0], [1], [0, 0, 1, 1], [], []>} : vector<8x128xf32>, vector<128x128xf32>, vector<8x128xf32> -> vector<8x128xf32>
    %cst_25 = arith.constant dense<0.000000e+00> : vector<8x128xf32>
    %83 = tpu.matmul %75, %4, %cst_25 {dimension_numbers = #tpu.dot_dimension_numbers<[1], [0], [0], [1], [0, 0, 1, 1], [], []>} : vector<8x32xf32>, vector<32x128xf32>, vector<8x128xf32> -> vector<8x128xf32>
    %84 = arith.addf %82, %83 : vector<8x128xf32>
    %85 = vector.extract_strided_slice %84 {offsets = [0, 0], sizes = [8, 32], strides = [1, 1]} : vector<8x128xf32> to vector<8x32xf32>
    %86 = arith.negf %85 : vector<8x32xf32>
    %87 = math.exp %86 : vector<8x32xf32>
    %cst_26 = arith.constant 1.000000e+00 : f32
    %88 = vector.broadcast %cst_26 : f32 to vector<8x32xf32>
    %89 = arith.addf %88, %87 : vector<8x32xf32>
    %90 = arith.divf %88, %89 : vector<8x32xf32>
    %91 = vector.extract_strided_slice %84 {offsets = [0, 32], sizes = [8, 32], strides = [1, 1]} : vector<8x128xf32> to vector<8x32xf32>
    %92 = arith.negf %91 : vector<8x32xf32>
    %93 = math.exp %92 : vector<8x32xf32>
    %cst_27 = arith.constant 1.000000e+00 : f32
    %94 = vector.broadcast %cst_27 : f32 to vector<8x32xf32>
    %95 = arith.addf %94, %93 : vector<8x32xf32>
    %96 = arith.divf %94, %95 : vector<8x32xf32>
    %97 = vector.extract_strided_slice %84 {offsets = [0, 64], sizes = [8, 32], strides = [1, 1]} : vector<8x128xf32> to vector<8x32xf32>
    %98 = math.tanh %97 : vector<8x32xf32>
    %99 = vector.extract_strided_slice %84 {offsets = [0, 96], sizes = [8, 32], strides = [1, 1]} : vector<8x128xf32> to vector<8x32xf32>
    %100 = arith.negf %99 : vector<8x32xf32>
    %101 = math.exp %100 : vector<8x32xf32>
    %cst_28 = arith.constant 1.000000e+00 : f32
    %102 = vector.broadcast %cst_28 : f32 to vector<8x32xf32>
    %103 = arith.addf %102, %101 : vector<8x32xf32>
    %104 = arith.divf %102, %103 : vector<8x32xf32>
    %105 = arith.mulf %96, %73 : vector<8x32xf32>
    %106 = arith.mulf %90, %98 : vector<8x32xf32>
    %107 = arith.addf %105, %106 : vector<8x32xf32>
    %108 = math.tanh %107 : vector<8x32xf32>
    %109 = arith.mulf %104, %108 : vector<8x32xf32>
    %c3 = arith.constant 3 : index
    %c0_29 = arith.constant 0 : index
    %c0_30 = arith.constant 0 : index
    %110 = vector.load %arg1[%c3, %c0_29, %c0_30] : memref<8x8x1xi32, #tpu.memory_space<vmem>>, vector<1x8x1xi32>
    %111 = vector.shape_cast %110 : vector<1x8x1xi32> to vector<8x1xi32>
    %112 = vector.broadcast %111 : vector<8x1xi32> to vector<8x128xi32>
    %113 = arith.cmpi eq, %112, %5 : vector<8x128xi32>
    %114 = arith.extui %113 : vector<8x128xi1> to vector<8x128xi32>
    %115 = arith.sitofp %114 : vector<8x128xi32> to vector<8x128xf32>
    %cst_31 = arith.constant dense<0.000000e+00> : vector<8x128xf32>
    %116 = tpu.matmul %115, %3, %cst_31 {dimension_numbers = #tpu.dot_dimension_numbers<[1], [0], [0], [1], [0, 0, 1, 1], [], []>} : vector<8x128xf32>, vector<128x128xf32>, vector<8x128xf32> -> vector<8x128xf32>
    %cst_32 = arith.constant dense<0.000000e+00> : vector<8x128xf32>
    %117 = tpu.matmul %109, %4, %cst_32 {dimension_numbers = #tpu.dot_dimension_numbers<[1], [0], [0], [1], [0, 0, 1, 1], [], []>} : vector<8x32xf32>, vector<32x128xf32>, vector<8x128xf32> -> vector<8x128xf32>
    %118 = arith.addf %116, %117 : vector<8x128xf32>
    %119 = vector.extract_strided_slice %118 {offsets = [0, 0], sizes = [8, 32], strides = [1, 1]} : vector<8x128xf32> to vector<8x32xf32>
    %120 = arith.negf %119 : vector<8x32xf32>
    %121 = math.exp %120 : vector<8x32xf32>
    %cst_33 = arith.constant 1.000000e+00 : f32
    %122 = vector.broadcast %cst_33 : f32 to vector<8x32xf32>
    %123 = arith.addf %122, %121 : vector<8x32xf32>
    %124 = arith.divf %122, %123 : vector<8x32xf32>
    %125 = vector.extract_strided_slice %118 {offsets = [0, 32], sizes = [8, 32], strides = [1, 1]} : vector<8x128xf32> to vector<8x32xf32>
    %126 = arith.negf %125 : vector<8x32xf32>
    %127 = math.exp %126 : vector<8x32xf32>
    %cst_34 = arith.constant 1.000000e+00 : f32
    %128 = vector.broadcast %cst_34 : f32 to vector<8x32xf32>
    %129 = arith.addf %128, %127 : vector<8x32xf32>
    %130 = arith.divf %128, %129 : vector<8x32xf32>
    %131 = vector.extract_strided_slice %118 {offsets = [0, 64], sizes = [8, 32], strides = [1, 1]} : vector<8x128xf32> to vector<8x32xf32>
    %132 = math.tanh %131 : vector<8x32xf32>
    %133 = vector.extract_strided_slice %118 {offsets = [0, 96], sizes = [8, 32], strides = [1, 1]} : vector<8x128xf32> to vector<8x32xf32>
    %134 = arith.negf %133 : vector<8x32xf32>
    %135 = math.exp %134 : vector<8x32xf32>
    %cst_35 = arith.constant 1.000000e+00 : f32
    %136 = vector.broadcast %cst_35 : f32 to vector<8x32xf32>
    %137 = arith.addf %136, %135 : vector<8x32xf32>
    %138 = arith.divf %136, %137 : vector<8x32xf32>
    %139 = arith.mulf %130, %107 : vector<8x32xf32>
    %140 = arith.mulf %124, %132 : vector<8x32xf32>
    %141 = arith.addf %139, %140 : vector<8x32xf32>
    %142 = math.tanh %141 : vector<8x32xf32>
    %143 = arith.mulf %138, %142 : vector<8x32xf32>
    %c4 = arith.constant 4 : index
    %c0_36 = arith.constant 0 : index
    %c0_37 = arith.constant 0 : index
    %144 = vector.load %arg1[%c4, %c0_36, %c0_37] : memref<8x8x1xi32, #tpu.memory_space<vmem>>, vector<1x8x1xi32>
    %145 = vector.shape_cast %144 : vector<1x8x1xi32> to vector<8x1xi32>
    %146 = vector.broadcast %145 : vector<8x1xi32> to vector<8x128xi32>
    %147 = arith.cmpi eq, %146, %5 : vector<8x128xi32>
    %148 = arith.extui %147 : vector<8x128xi1> to vector<8x128xi32>
    %149 = arith.sitofp %148 : vector<8x128xi32> to vector<8x128xf32>
    %cst_38 = arith.constant dense<0.000000e+00> : vector<8x128xf32>
    %150 = tpu.matmul %149, %3, %cst_38 {dimension_numbers = #tpu.dot_dimension_numbers<[1], [0], [0], [1], [0, 0, 1, 1], [], []>} : vector<8x128xf32>, vector<128x128xf32>, vector<8x128xf32> -> vector<8x128xf32>
    %cst_39 = arith.constant dense<0.000000e+00> : vector<8x128xf32>
    %151 = tpu.matmul %143, %4, %cst_39 {dimension_numbers = #tpu.dot_dimension_numbers<[1], [0], [0], [1], [0, 0, 1, 1], [], []>} : vector<8x32xf32>, vector<32x128xf32>, vector<8x128xf32> -> vector<8x128xf32>
    %152 = arith.addf %150, %151 : vector<8x128xf32>
    %153 = vector.extract_strided_slice %152 {offsets = [0, 0], sizes = [8, 32], strides = [1, 1]} : vector<8x128xf32> to vector<8x32xf32>
    %154 = arith.negf %153 : vector<8x32xf32>
    %155 = math.exp %154 : vector<8x32xf32>
    %cst_40 = arith.constant 1.000000e+00 : f32
    %156 = vector.broadcast %cst_40 : f32 to vector<8x32xf32>
    %157 = arith.addf %156, %155 : vector<8x32xf32>
    %158 = arith.divf %156, %157 : vector<8x32xf32>
    %159 = vector.extract_strided_slice %152 {offsets = [0, 32], sizes = [8, 32], strides = [1, 1]} : vector<8x128xf32> to vector<8x32xf32>
    %160 = arith.negf %159 : vector<8x32xf32>
    %161 = math.exp %160 : vector<8x32xf32>
    %cst_41 = arith.constant 1.000000e+00 : f32
    %162 = vector.broadcast %cst_41 : f32 to vector<8x32xf32>
    %163 = arith.addf %162, %161 : vector<8x32xf32>
    %164 = arith.divf %162, %163 : vector<8x32xf32>
    %165 = vector.extract_strided_slice %152 {offsets = [0, 64], sizes = [8, 32], strides = [1, 1]} : vector<8x128xf32> to vector<8x32xf32>
    %166 = math.tanh %165 : vector<8x32xf32>
    %167 = vector.extract_strided_slice %152 {offsets = [0, 96], sizes = [8, 32], strides = [1, 1]} : vector<8x128xf32> to vector<8x32xf32>
    %168 = arith.negf %167 : vector<8x32xf32>
    %169 = math.exp %168 : vector<8x32xf32>
    %cst_42 = arith.constant 1.000000e+00 : f32
    %170 = vector.broadcast %cst_42 : f32 to vector<8x32xf32>
    %171 = arith.addf %170, %169 : vector<8x32xf32>
    %172 = arith.divf %170, %171 : vector<8x32xf32>
    %173 = arith.mulf %164, %141 : vector<8x32xf32>
    %174 = arith.mulf %158, %166 : vector<8x32xf32>
    %175 = arith.addf %173, %174 : vector<8x32xf32>
    %176 = math.tanh %175 : vector<8x32xf32>
    %177 = arith.mulf %172, %176 : vector<8x32xf32>
    %c5 = arith.constant 5 : index
    %c0_43 = arith.constant 0 : index
    %c0_44 = arith.constant 0 : index
    %178 = vector.load %arg1[%c5, %c0_43, %c0_44] : memref<8x8x1xi32, #tpu.memory_space<vmem>>, vector<1x8x1xi32>
    %179 = vector.shape_cast %178 : vector<1x8x1xi32> to vector<8x1xi32>
    %180 = vector.broadcast %179 : vector<8x1xi32> to vector<8x128xi32>
    %181 = arith.cmpi eq, %180, %5 : vector<8x128xi32>
    %182 = arith.extui %181 : vector<8x128xi1> to vector<8x128xi32>
    %183 = arith.sitofp %182 : vector<8x128xi32> to vector<8x128xf32>
    %cst_45 = arith.constant dense<0.000000e+00> : vector<8x128xf32>
    %184 = tpu.matmul %183, %3, %cst_45 {dimension_numbers = #tpu.dot_dimension_numbers<[1], [0], [0], [1], [0, 0, 1, 1], [], []>} : vector<8x128xf32>, vector<128x128xf32>, vector<8x128xf32> -> vector<8x128xf32>
    %cst_46 = arith.constant dense<0.000000e+00> : vector<8x128xf32>
    %185 = tpu.matmul %177, %4, %cst_46 {dimension_numbers = #tpu.dot_dimension_numbers<[1], [0], [0], [1], [0, 0, 1, 1], [], []>} : vector<8x32xf32>, vector<32x128xf32>, vector<8x128xf32> -> vector<8x128xf32>
    %186 = arith.addf %184, %185 : vector<8x128xf32>
    %187 = vector.extract_strided_slice %186 {offsets = [0, 0], sizes = [8, 32], strides = [1, 1]} : vector<8x128xf32> to vector<8x32xf32>
    %188 = arith.negf %187 : vector<8x32xf32>
    %189 = math.exp %188 : vector<8x32xf32>
    %cst_47 = arith.constant 1.000000e+00 : f32
    %190 = vector.broadcast %cst_47 : f32 to vector<8x32xf32>
    %191 = arith.addf %190, %189 : vector<8x32xf32>
    %192 = arith.divf %190, %191 : vector<8x32xf32>
    %193 = vector.extract_strided_slice %186 {offsets = [0, 32], sizes = [8, 32], strides = [1, 1]} : vector<8x128xf32> to vector<8x32xf32>
    %194 = arith.negf %193 : vector<8x32xf32>
    %195 = math.exp %194 : vector<8x32xf32>
    %cst_48 = arith.constant 1.000000e+00 : f32
    %196 = vector.broadcast %cst_48 : f32 to vector<8x32xf32>
    %197 = arith.addf %196, %195 : vector<8x32xf32>
    %198 = arith.divf %196, %197 : vector<8x32xf32>
    %199 = vector.extract_strided_slice %186 {offsets = [0, 64], sizes = [8, 32], strides = [1, 1]} : vector<8x128xf32> to vector<8x32xf32>
    %200 = math.tanh %199 : vector<8x32xf32>
    %201 = vector.extract_strided_slice %186 {offsets = [0, 96], sizes = [8, 32], strides = [1, 1]} : vector<8x128xf32> to vector<8x32xf32>
    %202 = arith.negf %201 : vector<8x32xf32>
    %203 = math.exp %202 : vector<8x32xf32>
    %cst_49 = arith.constant 1.000000e+00 : f32
    %204 = vector.broadcast %cst_49 : f32 to vector<8x32xf32>
    %205 = arith.addf %204, %203 : vector<8x32xf32>
    %206 = arith.divf %204, %205 : vector<8x32xf32>
    %207 = arith.mulf %198, %175 : vector<8x32xf32>
    %208 = arith.mulf %192, %200 : vector<8x32xf32>
    %209 = arith.addf %207, %208 : vector<8x32xf32>
    %210 = math.tanh %209 : vector<8x32xf32>
    %211 = arith.mulf %206, %210 : vector<8x32xf32>
    %c6 = arith.constant 6 : index
    %c0_50 = arith.constant 0 : index
    %c0_51 = arith.constant 0 : index
    %212 = vector.load %arg1[%c6, %c0_50, %c0_51] : memref<8x8x1xi32, #tpu.memory_space<vmem>>, vector<1x8x1xi32>
    %213 = vector.shape_cast %212 : vector<1x8x1xi32> to vector<8x1xi32>
    %214 = vector.broadcast %213 : vector<8x1xi32> to vector<8x128xi32>
    %215 = arith.cmpi eq, %214, %5 : vector<8x128xi32>
    %216 = arith.extui %215 : vector<8x128xi1> to vector<8x128xi32>
    %217 = arith.sitofp %216 : vector<8x128xi32> to vector<8x128xf32>
    %cst_52 = arith.constant dense<0.000000e+00> : vector<8x128xf32>
    %218 = tpu.matmul %217, %3, %cst_52 {dimension_numbers = #tpu.dot_dimension_numbers<[1], [0], [0], [1], [0, 0, 1, 1], [], []>} : vector<8x128xf32>, vector<128x128xf32>, vector<8x128xf32> -> vector<8x128xf32>
    %cst_53 = arith.constant dense<0.000000e+00> : vector<8x128xf32>
    %219 = tpu.matmul %211, %4, %cst_53 {dimension_numbers = #tpu.dot_dimension_numbers<[1], [0], [0], [1], [0, 0, 1, 1], [], []>} : vector<8x32xf32>, vector<32x128xf32>, vector<8x128xf32> -> vector<8x128xf32>
    %220 = arith.addf %218, %219 : vector<8x128xf32>
    %221 = vector.extract_strided_slice %220 {offsets = [0, 0], sizes = [8, 32], strides = [1, 1]} : vector<8x128xf32> to vector<8x32xf32>
    %222 = arith.negf %221 : vector<8x32xf32>
    %223 = math.exp %222 : vector<8x32xf32>
    %cst_54 = arith.constant 1.000000e+00 : f32
    %224 = vector.broadcast %cst_54 : f32 to vector<8x32xf32>
    %225 = arith.addf %224, %223 : vector<8x32xf32>
    %226 = arith.divf %224, %225 : vector<8x32xf32>
    %227 = vector.extract_strided_slice %220 {offsets = [0, 32], sizes = [8, 32], strides = [1, 1]} : vector<8x128xf32> to vector<8x32xf32>
    %228 = arith.negf %227 : vector<8x32xf32>
    %229 = math.exp %228 : vector<8x32xf32>
    %cst_55 = arith.constant 1.000000e+00 : f32
    %230 = vector.broadcast %cst_55 : f32 to vector<8x32xf32>
    %231 = arith.addf %230, %229 : vector<8x32xf32>
    %232 = arith.divf %230, %231 : vector<8x32xf32>
    %233 = vector.extract_strided_slice %220 {offsets = [0, 64], sizes = [8, 32], strides = [1, 1]} : vector<8x128xf32> to vector<8x32xf32>
    %234 = math.tanh %233 : vector<8x32xf32>
    %235 = vector.extract_strided_slice %220 {offsets = [0, 96], sizes = [8, 32], strides = [1, 1]} : vector<8x128xf32> to vector<8x32xf32>
    %236 = arith.negf %235 : vector<8x32xf32>
    %237 = math.exp %236 : vector<8x32xf32>
    %cst_56 = arith.constant 1.000000e+00 : f32
    %238 = vector.broadcast %cst_56 : f32 to vector<8x32xf32>
    %239 = arith.addf %238, %237 : vector<8x32xf32>
    %240 = arith.divf %238, %239 : vector<8x32xf32>
    %241 = arith.mulf %232, %209 : vector<8x32xf32>
    %242 = arith.mulf %226, %234 : vector<8x32xf32>
    %243 = arith.addf %241, %242 : vector<8x32xf32>
    %244 = math.tanh %243 : vector<8x32xf32>
    %245 = arith.mulf %240, %244 : vector<8x32xf32>
    %c7 = arith.constant 7 : index
    %c0_57 = arith.constant 0 : index
    %c0_58 = arith.constant 0 : index
    %246 = vector.load %arg1[%c7, %c0_57, %c0_58] : memref<8x8x1xi32, #tpu.memory_space<vmem>>, vector<1x8x1xi32>
    %247 = vector.shape_cast %246 : vector<1x8x1xi32> to vector<8x1xi32>
    %248 = vector.broadcast %247 : vector<8x1xi32> to vector<8x128xi32>
    %249 = arith.cmpi eq, %248, %5 : vector<8x128xi32>
    %250 = arith.extui %249 : vector<8x128xi1> to vector<8x128xi32>
    %251 = arith.sitofp %250 : vector<8x128xi32> to vector<8x128xf32>
    %cst_59 = arith.constant dense<0.000000e+00> : vector<8x128xf32>
    %252 = tpu.matmul %251, %3, %cst_59 {dimension_numbers = #tpu.dot_dimension_numbers<[1], [0], [0], [1], [0, 0, 1, 1], [], []>} : vector<8x128xf32>, vector<128x128xf32>, vector<8x128xf32> -> vector<8x128xf32>
    %cst_60 = arith.constant dense<0.000000e+00> : vector<8x128xf32>
    %253 = tpu.matmul %245, %4, %cst_60 {dimension_numbers = #tpu.dot_dimension_numbers<[1], [0], [0], [1], [0, 0, 1, 1], [], []>} : vector<8x32xf32>, vector<32x128xf32>, vector<8x128xf32> -> vector<8x128xf32>
    %254 = arith.addf %252, %253 : vector<8x128xf32>
    %255 = vector.extract_strided_slice %254 {offsets = [0, 0], sizes = [8, 32], strides = [1, 1]} : vector<8x128xf32> to vector<8x32xf32>
    %256 = arith.negf %255 : vector<8x32xf32>
    %257 = math.exp %256 : vector<8x32xf32>
    %cst_61 = arith.constant 1.000000e+00 : f32
    %258 = vector.broadcast %cst_61 : f32 to vector<8x32xf32>
    %259 = arith.addf %258, %257 : vector<8x32xf32>
    %260 = arith.divf %258, %259 : vector<8x32xf32>
    %261 = vector.extract_strided_slice %254 {offsets = [0, 32], sizes = [8, 32], strides = [1, 1]} : vector<8x128xf32> to vector<8x32xf32>
    %262 = arith.negf %261 : vector<8x32xf32>
    %263 = math.exp %262 : vector<8x32xf32>
    %cst_62 = arith.constant 1.000000e+00 : f32
    %264 = vector.broadcast %cst_62 : f32 to vector<8x32xf32>
    %265 = arith.addf %264, %263 : vector<8x32xf32>
    %266 = arith.divf %264, %265 : vector<8x32xf32>
    %267 = vector.extract_strided_slice %254 {offsets = [0, 64], sizes = [8, 32], strides = [1, 1]} : vector<8x128xf32> to vector<8x32xf32>
    %268 = math.tanh %267 : vector<8x32xf32>
    %269 = vector.extract_strided_slice %254 {offsets = [0, 96], sizes = [8, 32], strides = [1, 1]} : vector<8x128xf32> to vector<8x32xf32>
    %270 = arith.negf %269 : vector<8x32xf32>
    %271 = math.exp %270 : vector<8x32xf32>
    %cst_63 = arith.constant 1.000000e+00 : f32
    %272 = vector.broadcast %cst_63 : f32 to vector<8x32xf32>
    %273 = arith.addf %272, %271 : vector<8x32xf32>
    %274 = arith.divf %272, %273 : vector<8x32xf32>
    %275 = arith.mulf %266, %243 : vector<8x32xf32>
    %276 = arith.mulf %260, %268 : vector<8x32xf32>
    %277 = arith.addf %275, %276 : vector<8x32xf32>
    %278 = math.tanh %277 : vector<8x32xf32>
    %279 = arith.mulf %274, %278 : vector<8x32xf32>
    %c0_64 = arith.constant 0 : index
    %c0_65 = arith.constant 0 : index
    %280 = vector.load %arg7[%c0_64, %c0_65] : memref<8x32xf32, #tpu.memory_space<vmem>>, vector<8x32xf32>
    tpu.vector_store %arg7[%c0_64, %c0_65], %279 {strides = array<i32>} : memref<8x32xf32, #tpu.memory_space<vmem>>, vector<8x32xf32>,
    %c0_66 = arith.constant 0 : index
    %c0_67 = arith.constant 0 : index
    %281 = vector.load %arg8[%c0_66, %c0_67] : memref<8x32xf32, #tpu.memory_space<vmem>>, vector<8x32xf32>
    tpu.vector_store %arg8[%c0_66, %c0_67], %277 {strides = array<i32>} : memref<8x32xf32, #tpu.memory_space<vmem>>, vector<8x32xf32>,
    %c0_i32_68 = arith.constant 0 : i32
    %282 = arith.cmpi eq, %arg0, %c0_i32_68 : i32
    %283 = arith.extui %282 : i1 to i32
    %c0_i32_69 = arith.constant 0 : i32
    %284 = arith.cmpi ne, %283, %c0_i32_69 : i32
    scf.if %284 {
      %c0_70 = arith.constant 0 : index
      %c0_71 = arith.constant 0 : index
      %285 = vector.load %arg4[%c0_70, %c0_71] : memref<32x128xf32, #tpu.memory_space<vmem>>, vector<32x128xf32>
      %cst_72 = arith.constant dense<0.000000e+00> : vector<8x128xf32>
      %286 = tpu.matmul %279, %285, %cst_72 {dimension_numbers = #tpu.dot_dimension_numbers<[1], [0], [0], [1], [0, 0, 1, 1], [], []>} : vector<8x32xf32>, vector<32x128xf32>, vector<8x128xf32> -> vector<8x128xf32>
      %c0_73 = arith.constant 0 : index
      %c0_74 = arith.constant 0 : index
      %287 = vector.load %arg5[%c0_73, %c0_74] : memref<1x128xf32, #tpu.memory_space<vmem>>, vector<1x128xf32>
      %288 = vector.broadcast %287 : vector<1x128xf32> to vector<8x128xf32>
      %289 = arith.addf %286, %288 : vector<8x128xf32>
      %c0_75 = arith.constant 0 : index
      %c0_76 = arith.constant 0 : index
      %290 = vector.load %arg6[%c0_75, %c0_76] : memref<8x128xf32, #tpu.memory_space<vmem>>, vector<8x128xf32>
      tpu.vector_store %arg6[%c0_75, %c0_76], %289 {strides = array<i32>} : memref<8x128xf32, #tpu.memory_space<vmem>>, vector<8x128xf32>,
    } else {
    }
    return
  }
  func.func @transform_0(%arg0: i32) -> (i32, i32, i32) {
    %c0_i32 = arith.constant 0 : i32
    %c0_i32_0 = arith.constant 0 : i32
    %c0_i32_1 = arith.constant 0 : i32
    return %arg0, %c0_i32, %c0_i32_0 : i32, i32, i32
  }
  func.func @transform_1(%arg0: i32) -> (i32, i32) {
    %c0_i32 = arith.constant 0 : i32
    %c0_i32_0 = arith.constant 0 : i32
    %c0_i32_1 = arith.constant 0 : i32
    return %c0_i32, %c0_i32_0 : i32, i32
  }
  func.func @transform_2(%arg0: i32) -> (i32, i32) {
    %c0_i32 = arith.constant 0 : i32
    %c0_i32_0 = arith.constant 0 : i32
    %c0_i32_1 = arith.constant 0 : i32
    return %c0_i32, %c0_i32_0 : i32, i32
  }
  func.func @transform_3(%arg0: i32) -> (i32, i32) {
    %c0_i32 = arith.constant 0 : i32
    %c0_i32_0 = arith.constant 0 : i32
    %c0_i32_1 = arith.constant 0 : i32
    return %c0_i32, %c0_i32_0 : i32, i32
  }
  func.func @transform_4(%arg0: i32) -> (i32, i32) {
    %c0_i32 = arith.constant 0 : i32
    %c0_i32_0 = arith.constant 0 : i32
    %c0_i32_1 = arith.constant 0 : i32
    return %c0_i32, %c0_i32_0 : i32, i32
  }
  func.func @transform_5(%arg0: i32) -> (i32, i32) {
    %c0_i32 = arith.constant 0 : i32
    %c0_i32_0 = arith.constant 0 : i32
    %c0_i32_1 = arith.constant 0 : i32
    return %c0_i32, %c0_i32_0 : i32, i32
  }
}

</mosaic_0001>

<llo_original>
// kernel: tpu_custom_call.1
$region0: #{tpu_custom_call.1}
  #allocation0 [shape = 'u32[]', space=smem, size = 0x4, offset = 0x4, fixed_abs, tag = 'smem constant byte address 0x4 - core index']
  #allocation1 [shape = 'u32[144,128]{1,0:T(1,128)}', space=vmem, size = 0x12000, scoped, tag = 'internal scratch']
  #allocation2 [shape = 'f32[8,32]{1,0:T(8,128)}', space=vmem, size = 0x1000, scoped, tag = 'scratch operand']
  #allocation3 [shape = 'f32[8,32]{1,0:T(8,128)}', space=vmem, size = 0x1000, scoped, tag = 'scratch operand']
  %s0 = inlined_call_operand.vmem [shape: s32[8,8,1], index: 0, kind: input, shape index: {}]
  %s1 = inlined_call_operand.hbm [shape: f32[128,128], index: 1, kind: input, shape index: {}]
  %s2 = inlined_call_operand.vmem [shape: f32[32,128], index: 2, kind: input, shape index: {}]
  %s3 = inlined_call_operand.vmem [shape: f32[32,128], index: 3, kind: input, shape index: {}]
  %s4 = inlined_call_operand.vmem [shape: f32[1,128], index: 4, kind: input, shape index: {}]
  %s5 = inlined_call_operand.hbm [shape: f32[8,128], index: 5, kind: output, shape index: {}]
  %s6 = sld [smem:[#allocation0]]
  $region42: #{tpu_custom_call.1} parent=0
    _
  %s8 = ssub.s32 1, %s6
  %s9 = scalar_select 0, %s8, %s6
  $region1: #{tpu_custom_call.1} parent=0
    #allocation4 [shape = 'u8[65536]{0}', space=vmem, size = 0x10000, scoped, tag = 'input window, operand 1, single buffered']
    #allocation5 [shape = 's32[1]{0}', space=sflag, size = 0x4, scoped, tag = 'scoped memory for tpu_custom_call.1']
    #allocation6 [shape = 's32[1]{0}', space=sflag, size = 0x4, scoped, tag = 'scoped memory for tpu_custom_call.1']
    #allocation7 [shape = 'u8[4096]{0}', space=vmem, size = 0x1000, scoped, tag = 'output window, operand 0, single buffered']
    %10 = vsyncpa [#allocation5], 0
    %11 = vsyncpa [#allocation6], 0
    // Predicated region
    $region2: #{tpu_custom_call.1} parent=1 // pred_check
      _
    $region3: #{tpu_custom_call.1} parent=1 // pred_check_branch
      %13 = sbr.rel (0) target = $region5
    $region4: #{tpu_custom_call.1} parent=1 // pred_region
      _
    $region5: #{tpu_custom_call.1} parent=1 // pred_fallthru
      _
    // Predicated region
    $region6: #{tpu_custom_call.1} parent=1 // pred_check
      _
    $region7: #{tpu_custom_call.1} parent=1 // pred_check_branch
      %15 = sbr.rel (0) target = $region9
    $region8: #{tpu_custom_call.1} parent=1 // pred_region
      %s17 = ssub.s32 2048, 2048
      %18 = vsyncadd [#allocation5], %s17
      %s19 = sshll.u32 [#allocation4], 4
      %s20 = int_to_ptr.vmem [resolvable:$true] %s19
      %25 = dma.hbm_to_vmem [thread:$0]  %s1, 2048, %s20, [#allocation5], 128, 128, 8
    $region9: #{tpu_custom_call.1} parent=1 // pred_fallthru
      _
    // Predicated region
    $region10: #{tpu_custom_call.1} parent=1 // pred_check
      _
    $region11: #{tpu_custom_call.1} parent=1 // pred_check_branch
      %27 = sbr.rel (0) target = $region13
    $region12: #{tpu_custom_call.1} parent=1 // pred_region
      _
    $region13: #{tpu_custom_call.1} parent=1 // pred_fallthru
      _
    // Predicated region
    $region14: #{tpu_custom_call.1} parent=1 // pred_check
      _
    $region15: #{tpu_custom_call.1} parent=1 // pred_check_branch
      %29 = sbr.rel (0) target = $region17
    $region16: #{tpu_custom_call.1} parent=1 // pred_region
      _
    $region17: #{tpu_custom_call.1} parent=1 // pred_fallthru
      _
    // Predicated region
    $region18: #{tpu_custom_call.1} parent=1 // pred_check
      _
    $region19: #{tpu_custom_call.1} parent=1 // pred_check_branch
      %31 = sbr.rel (0) target = $region21
    $region20: #{tpu_custom_call.1} parent=1 // pred_region
      _
    $region21: #{tpu_custom_call.1} parent=1 // pred_fallthru
      _
    // Predicated region
    $region22: #{tpu_custom_call.1} parent=1 // pred_check
      _
    $region23: #{tpu_custom_call.1} parent=1 // pred_check_branch
      %33 = sbr.rel (0) target = $region25
    $region24: #{tpu_custom_call.1} parent=1 // pred_region
      %34 = dma.done [#allocation5], 2048
    $region25: #{tpu_custom_call.1} parent=1 // pred_fallthru
      _
    %p35 = scmp.eq.s32.totalorder 0, 0
    // Predicated region
    $region26: #{tpu_custom_call.1} parent=1 // pred_check
      %p36 = pneg %p35
    $region27: #{tpu_custom_call.1} parent=1 // pred_check_branch
      %38 = sbr.rel (%p36) target = $region29
    $region28: #{tpu_custom_call.1} parent=1 // pred_region
      %vm39 = vcmask 261120
      %40 = vst.msk [vmem:[#allocation2] sm:$0xff] %vm39, 0.0
      %41 = vst.msk [vmem:[#allocation3] sm:$0xff] %vm39, 0.0
    $region29: #{tpu_custom_call.1} parent=1 // pred_fallthru
      _
    %v42 = vld [vmem:[#allocation4] sm:$0xff]
    %v43 = vld [vmem:[#allocation4 + $0x8] sm:$0xff]
    %v44 = vld [vmem:[#allocation4 + $0x10] sm:$0xff]
    %v45 = vld [vmem:[#allocation4 + $0x18] sm:$0xff]
    %v46 = vld [vmem:[#allocation4 + $0x20] sm:$0xff]
    %v47 = vld [vmem:[#allocation4 + $0x28] sm:$0xff]
    %v48 = vld [vmem:[#allocation4 + $0x30] sm:$0xff]
    %v49 = vld [vmem:[#allocation4 + $0x38] sm:$0xff]
    %v50 = vld [vmem:[#allocation4 + $0x40] sm:$0xff]
    %v51 = vld [vmem:[#allocation4 + $0x48] sm:$0xff]
    %v52 = vld [vmem:[#allocation4 + $0x50] sm:$0xff]
    %v53 = vld [vmem:[#allocation4 + $0x58] sm:$0xff]
    %v54 = vld [vmem:[#allocation4 + $0x60] sm:$0xff]
    %v55 = vld [vmem:[#allocation4 + $0x68] sm:$0xff]
    %v56 = vld [vmem:[#allocation4 + $0x70] sm:$0xff]
    %v57 = vld [vmem:[#allocation4 + $0x78] sm:$0xff]
    %v58 = vld [vmem:[%s2] sm:$0xff]
    %v59 = vld [vmem:[%s2 + $0x8] sm:$0xff]
    %v60 = vld [vmem:[%s2 + $0x10] sm:$0xff]
    %v61 = vld [vmem:[%s2 + $0x18] sm:$0xff]
    %v62 = vlaneseq
    %v63 = vand.u32 %v62, 127
    %v64 = vld [vmem:[#allocation2] sm:$0xff]
    %v65 = vld [vmem:[#allocation3] sm:$0xff]
    %v66 = vld [vmem:[%s0] sm:$0xff]
    %67 = vset.pattern.permute.xlu0 0
    %68 = vperm.xlu0 %67, %v66
    %v69 = vpop.permute.xlu0 %68
    %vm70 = vcmp.eq.s32.totalorder %v69, %v63
    %v71 = vsel %vm70, 1, 0
    %v72 = vcvt.s32.f32 %v71
    %vm73 = vcmask 261120
    %v75 = vsel %vm73, %v64, 0
    %77 = vmatprep.subr.mxu0 0.0
    %78 = vmatpush1.msra.mxu0 0.0
    %79 = vmatprep.subr.mxu0 0.0
    %80 = vmatpush1.msra.mxu0 0.0
    %81 = vmatprep.subr.mxu0 0.0
    %82 = vmatpush1.msra.mxu0 0.0
    %83 = vmatprep.subr.mxu0 0.0
    %84 = vmatpush1.msra.mxu0 0.0
    %85 = vmatprep.subr.mxu0 0.0
    %86 = vmatpush1.msra.mxu0 0.0
    %87 = vmatprep.subr.mxu0 0.0
    %88 = vmatpush1.msra.mxu0 0.0
    %89 = vmatprep.subr.mxu0 0.0
    %90 = vmatpush1.msra.mxu0 0.0
    %91 = vmatprep.subr.mxu0 0.0
    %92 = vmatpush1.msra.mxu0 0.0
    %93 = vmatprep.subr.mxu0 0.0
    %94 = vmatpush1.msra.mxu0 0.0
    %95 = vmatprep.subr.mxu0 0.0
    %96 = vmatpush1.msra.mxu0 0.0
    %97 = vmatprep.subr.mxu0 0.0
    %98 = vmatpush1.msra.mxu0 0.0
    %99 = vmatprep.subr.mxu0 0.0
    %100 = vmatpush1.msra.mxu0 0.0
    %101 = vmatprep.subr.mxu0 0.0
    %102 = vmatpush1.msra.mxu0 %v61
    %103 = vmatprep.subr.mxu0 0.0
    %104 = vmatpush1.msra.mxu0 %v60
    %105 = vmatprep.subr.mxu0 0.0
    %106 = vmatpush1.msra.mxu0 %v59
    %107 = vmatprep.subr.mxu0 0.0
    %108 = vmatpush1.msra.mxu0 %v58
    %109 = vmatprep.subr.mxu0 0.0
    %110 = vmatpush2.msra.mxu0 0.0
    %111 = vmatprep.subr.mxu0 0.0
    %112 = vmatpush2.msra.mxu0 0.0
    %113 = vmatprep.subr.mxu0 0.0
    %114 = vmatpush2.msra.mxu0 0.0
    %115 = vmatprep.subr.mxu0 0.0
    %116 = vmatpush2.msra.mxu0 0.0
    %117 = vmatprep.subr.mxu0 0.0
    %118 = vmatpush2.msra.mxu0 0.0
    %119 = vmatprep.subr.mxu0 0.0
    %120 = vmatpush2.msra.mxu0 0.0
    %121 = vmatprep.subr.mxu0 0.0
    %122 = vmatpush2.msra.mxu0 0.0
    %123 = vmatprep.subr.mxu0 0.0
    %124 = vmatpush2.msra.mxu0 0.0
    %125 = vmatprep.subr.mxu0 0.0
    %126 = vmatpush2.msra.mxu0 0.0
    %127 = vmatprep.subr.mxu0 0.0
    %128 = vmatpush2.msra.mxu0 0.0
    %129 = vmatprep.subr.mxu0 0.0
    %130 = vmatpush2.msra.mxu0 0.0
    %131 = vmatprep.subr.mxu0 0.0
    %132 = vmatpush2.msra.mxu0 0.0
    %133 = vmatprep.subr.mxu0 0.0
    %134 = vmatpush2.msra.mxu0 0.0
    %135 = vmatprep.subr.mxu0 0.0
    %136 = vmatpush2.msra.mxu0 0.0
    %137 = vmatprep.subr.mxu0 0.0
    %138 = vmatpush2.msra.mxu0 0.0
    %139 = vmatprep.subr.mxu0 0.0
    %140 = vmatpush2.msra.mxu0 0.0
    %141 = vmatprep.mubr.f32.mxu0 0.0
    %142 = vmatmul.mubr.f32.gmra.mxu0 %v75
    %v143 = vpop.f32.mrf.mxu0
    %v144 = vadd.f32 0.0, %v143
    %v145 = vpop.f32.mrf.mxu0
    %146 = vdwg.mxu0
    %147 = vmatprep.subr.mxu0 0.0
    %148 = vmatpush1.msra.mxu0 %v57
    %149 = vmatprep.subr.mxu0 0.0
    %150 = vmatpush1.msra.mxu0 %v56
    %151 = vmatprep.subr.mxu0 0.0
    %152 = vmatpush1.msra.mxu0 %v55
    %153 = vmatprep.subr.mxu0 0.0
    %154 = vmatpush1.msra.mxu0 %v54
    %155 = vmatprep.subr.mxu0 0.0
    %156 = vmatpush1.msra.mxu0 %v53
    %157 = vmatprep.subr.mxu0 0.0
    %158 = vmatpush1.msra.mxu0 %v52
    %159 = vmatprep.subr.mxu0 0.0
    %160 = vmatpush1.msra.mxu0 %v51
    %161 = vmatprep.subr.mxu0 0.0
    %162 = vmatpush1.msra.mxu0 %v50
    %163 = vmatprep.subr.mxu0 0.0
    %164 = vmatpush1.msra.mxu0 %v49
    %165 = vmatprep.subr.mxu0 0.0
    %166 = vmatpush1.msra.mxu0 %v48
    %167 = vmatprep.subr.mxu0 0.0
    %168 = vmatpush1.msra.mxu0 %v47
    %169 = vmatprep.subr.mxu0 0.0
    %170 = vmatpush1.msra.mxu0 %v46
    %171 = vmatprep.subr.mxu0 0.0
    %172 = vmatpush1.msra.mxu0 %v45
    %173 = vmatprep.subr.mxu0 0.0
    %174 = vmatpush1.msra.mxu0 %v44
    %175 = vmatprep.subr.mxu0 0.0
    %176 = vmatpush1.msra.mxu0 %v43
    %177 = vmatprep.subr.mxu0 0.0
    %178 = vmatpush1.msra.mxu0 %v42
    %179 = vmatprep.subr.mxu0 0.0
    %180 = vmatpush2.msra.mxu0 0.0
    %181 = vmatprep.subr.mxu0 0.0
    %182 = vmatpush2.msra.mxu0 0.0
    %183 = vmatprep.subr.mxu0 0.0
    %184 = vmatpush2.msra.mxu0 0.0
    %185 = vmatprep.subr.mxu0 0.0
    %186 = vmatpush2.msra.mxu0 0.0
    %187 = vmatprep.subr.mxu0 0.0
    %188 = vmatpush2.msra.mxu0 0.0
    %189 = vmatprep.subr.mxu0 0.0
    %190 = vmatpush2.msra.mxu0 0.0
    %191 = vmatprep.subr.mxu0 0.0
    %192 = vmatpush2.msra.mxu0 0.0
    %193 = vmatprep.subr.mxu0 0.0
    %194 = vmatpush2.msra.mxu0 0.0
    %195 = vmatprep.subr.mxu0 0.0
    %196 = vmatpush2.msra.mxu0 0.0
    %197 = vmatprep.subr.mxu0 0.0
    %198 = vmatpush2.msra.mxu0 0.0
    %199 = vmatprep.subr.mxu0 0.0
    %200 = vmatpush2.msra.mxu0 0.0
    %201 = vmatprep.subr.mxu0 0.0
    %202 = vmatpush2.msra.mxu0 0.0
    %203 = vmatprep.subr.mxu0 0.0
    %204 = vmatpush2.msra.mxu0 0.0
    %205 = vmatprep.subr.mxu0 0.0
    %206 = vmatpush2.msra.mxu0 0.0
    %207 = vmatprep.subr.mxu0 0.0
    %208 = vmatpush2.msra.mxu0 0.0
    %209 = vmatprep.subr.mxu0 0.0
    %210 = vmatpush2.msra.mxu0 0.0
    %211 = vmatprep.mubr.f32.mxu0 0.0
    %212 = vmatmul.mubr.f32.gmra.mxu0 %v72
    %v213 = vpop.f32.mrf.mxu0
    %v214 = vadd.f32 %v144, %v213
    %v215 = vpop.f32.mrf.mxu0
    %216 = vdwg.mxu0
    %v217 = vxor.u32 %v214, 2147483648
    %v218 = vmul.f32 %v217, 1.442695
    %v219 = vpow.pop %v218
    %v220 = vadd.f32 %v219, 1.0
    %v221 = vrcp.pop %v220
    %v222 = vmul.f32 1.0, %v221
    %v223 = vtanh.pop %v214
    %225 = vrot.lane.b32.xlu0 %v65, 32
    %v226 = vpop.permute.xlu0 %225
    %v228 = vmul.f32 %v222, %v226
    %230 = vrot.lane.b32.xlu0 %v223, 64
    %v231 = vpop.permute.xlu0 %230
    %v233 = vmul.f32 %v222, %v231
    %235 = vrot.lane.b32.xlu0 %v233, 32
    %v236 = vpop.permute.xlu0 %235
    %v238 = vadd.f32 %v228, %v236
    %v239 = vtanh.pop %v238
    %241 = vrot.lane.b32.xlu0 %v239, 64
    %v242 = vpop.permute.xlu0 %241
    %v244 = vmul.f32 %v222, %v242
    %s245 = scalar_lea.vmem %s0, 8
    %v246 = vld [vmem:[%s245] sm:$0xff]
    %247 = vset.pattern.permute.xlu0 0
    %248 = vperm.xlu0 %247, %v246
    %v249 = vpop.permute.xlu0 %248
    %vm250 = vcmp.eq.s32.totalorder %v249, %v63
    %v251 = vsel %vm250, 1, 0
    %v252 = vcvt.s32.f32 %v251
    %254 = vrot.lane.b32.xlu0 %v244, 32
    %v255 = vpop.permute.xlu0 %254
    %v256 = vsel %vm73, %v255, 0
    %258 = vmatprep.subr.mxu0 0.0
    %259 = vmatpush1.msra.mxu0 0.0
    %260 = vmatprep.subr.mxu0 0.0
    %261 = vmatpush1.msra.mxu0 0.0
    %262 = vmatprep.subr.mxu0 0.0
    %263 = vmatpush1.msra.mxu0 0.0
    %264 = vmatprep.subr.mxu0 0.0
    %265 = vmatpush1.msra.mxu0 0.0
    %266 = vmatprep.subr.mxu0 0.0
    %267 = vmatpush1.msra.mxu0 0.0
    %268 = vmatprep.subr.mxu0 0.0
    %269 = vmatpush1.msra.mxu0 0.0
    %270 = vmatprep.subr.mxu0 0.0
    %271 = vmatpush1.msra.mxu0 0.0
    %272 = vmatprep.subr.mxu0 0.0
    %273 = vmatpush1.msra.mxu0 0.0
    %274 = vmatprep.subr.mxu0 0.0
    %275 = vmatpush1.msra.mxu0 0.0
    %276 = vmatprep.subr.mxu0 0.0
    %277 = vmatpush1.msra.mxu0 0.0
    %278 = vmatprep.subr.mxu0 0.0
    %279 = vmatpush1.msra.mxu0 0.0
    %280 = vmatprep.subr.mxu0 0.0
    %281 = vmatpush1.msra.mxu0 0.0
    %282 = vmatprep.subr.mxu0 0.0
    %283 = vmatpush1.msra.mxu0 %v61
    %284 = vmatprep.subr.mxu0 0.0
    %285 = vmatpush1.msra.mxu0 %v60
    %286 = vmatprep.subr.mxu0 0.0
    %287 = vmatpush1.msra.mxu0 %v59
    %288 = vmatprep.subr.mxu0 0.0
    %289 = vmatpush1.msra.mxu0 %v58
    %290 = vmatprep.subr.mxu0 0.0
    %291 = vmatpush2.msra.mxu0 0.0
    %292 = vmatprep.subr.mxu0 0.0
    %293 = vmatpush2.msra.mxu0 0.0
    %294 = vmatprep.subr.mxu0 0.0
    %295 = vmatpush2.msra.mxu0 0.0
    %296 = vmatprep.subr.mxu0 0.0
    %297 = vmatpush2.msra.mxu0 0.0
    %298 = vmatprep.subr.mxu0 0.0
    %299 = vmatpush2.msra.mxu0 0.0
    %300 = vmatprep.subr.mxu0 0.0
    %301 = vmatpush2.msra.mxu0 0.0
    %302 = vmatprep.subr.mxu0 0.0
    %303 = vmatpush2.msra.mxu0 0.0
    %304 = vmatprep.subr.mxu0 0.0
    %305 = vmatpush2.msra.mxu0 0.0
    %306 = vmatprep.subr.mxu0 0.0
    %307 = vmatpush2.msra.mxu0 0.0
    %308 = vmatprep.subr.mxu0 0.0
    %309 = vmatpush2.msra.mxu0 0.0
    %310 = vmatprep.subr.mxu0 0.0
    %311 = vmatpush2.msra.mxu0 0.0
    %312 = vmatprep.subr.mxu0 0.0
    %313 = vmatpush2.msra.mxu0 0.0
    %314 = vmatprep.subr.mxu0 0.0
    %315 = vmatpush2.msra.mxu0 0.0
    %316 = vmatprep.subr.mxu0 0.0
    %317 = vmatpush2.msra.mxu0 0.0
    %318 = vmatprep.subr.mxu0 0.0
    %319 = vmatpush2.msra.mxu0 0.0
    %320 = vmatprep.subr.mxu0 0.0
    %321 = vmatpush2.msra.mxu0 0.0
    %322 = vmatprep.mubr.f32.mxu0 0.0
    %323 = vmatmul.mubr.f32.gmra.mxu0 %v256
    %v324 = vpop.f32.mrf.mxu0
    %v325 = vadd.f32 0.0, %v324
    %v326 = vpop.f32.mrf.mxu0
    %327 = vdwg.mxu0
    %328 = vmatprep.subr.mxu0 0.0
    %329 = vmatpush1.msra.mxu0 %v57
    %330 = vmatprep.subr.mxu0 0.0
    %331 = vmatpush1.msra.mxu0 %v56
    %332 = vmatprep.subr.mxu0 0.0
    %333 = vmatpush1.msra.mxu0 %v55
    %334 = vmatprep.subr.mxu0 0.0
    %335 = vmatpush1.msra.mxu0 %v54
    %336 = vmatprep.subr.mxu0 0.0
    %337 = vmatpush1.msra.mxu0 %v53
    %338 = vmatprep.subr.mxu0 0.0
    %339 = vmatpush1.msra.mxu0 %v52
    %340 = vmatprep.subr.mxu0 0.0
    %341 = vmatpush1.msra.mxu0 %v51
    %342 = vmatprep.subr.mxu0 0.0
    %343 = vmatpush1.msra.mxu0 %v50
    %344 = vmatprep.subr.mxu0 0.0
    %345 = vmatpush1.msra.mxu0 %v49
    %346 = vmatprep.subr.mxu0 0.0
    %347 = vmatpush1.msra.mxu0 %v48
    %348 = vmatprep.subr.mxu0 0.0
    %349 = vmatpush1.msra.mxu0 %v47
    %350 = vmatprep.subr.mxu0 0.0
    %351 = vmatpush1.msra.mxu0 %v46
    %352 = vmatprep.subr.mxu0 0.0
    %353 = vmatpush1.msra.mxu0 %v45
    %354 = vmatprep.subr.mxu0 0.0
    %355 = vmatpush1.msra.mxu0 %v44
    %356 = vmatprep.subr.mxu0 0.0
    %357 = vmatpush1.msra.mxu0 %v43
    %358 = vmatprep.subr.mxu0 0.0
    %359 = vmatpush1.msra.mxu0 %v42
    %360 = vmatprep.subr.mxu0 0.0
    %361 = vmatpush2.msra.mxu0 0.0
    %362 = vmatprep.subr.mxu0 0.0
    %363 = vmatpush2.msra.mxu0 0.0
    %364 = vmatprep.subr.mxu0 0.0
    %365 = vmatpush2.msra.mxu0 0.0
    %366 = vmatprep.subr.mxu0 0.0
    %367 = vmatpush2.msra.mxu0 0.0
    %368 = vmatprep.subr.mxu0 0.0
    %369 = vmatpush2.msra.mxu0 0.0
    %370 = vmatprep.subr.mxu0 0.0
    %371 = vmatpush2.msra.mxu0 0.0
    %372 = vmatprep.subr.mxu0 0.0
    %373 = vmatpush2.msra.mxu0 0.0
    %374 = vmatprep.subr.mxu0 0.0
    %375 = vmatpush2.msra.mxu0 0.0
    %376 = vmatprep.subr.mxu0 0.0
    %377 = vmatpush2.msra.mxu0 0.0
    %378 = vmatprep.subr.mxu0 0.0
    %379 = vmatpush2.msra.mxu0 0.0
    %380 = vmatprep.subr.mxu0 0.0
    %381 = vmatpush2.msra.mxu0 0.0
    %382 = vmatprep.subr.mxu0 0.0
    %383 = vmatpush2.msra.mxu0 0.0
    %384 = vmatprep.subr.mxu0 0.0
    %385 = vmatpush2.msra.mxu0 0.0
    %386 = vmatprep.subr.mxu0 0.0
    %387 = vmatpush2.msra.mxu0 0.0
    %388 = vmatprep.subr.mxu0 0.0
    %389 = vmatpush2.msra.mxu0 0.0
    %390 = vmatprep.subr.mxu0 0.0
    %391 = vmatpush2.msra.mxu0 0.0
    %392 = vmatprep.mubr.f32.mxu0 0.0
    %393 = vmatmul.mubr.f32.gmra.mxu0 %v252
    %v394 = vpop.f32.mrf.mxu0
    %v395 = vadd.f32 %v325, %v394
    %v396 = vpop.f32.mrf.mxu0
    %397 = vdwg.mxu0
    %v398 = vxor.u32 %v395, 2147483648
    %v399 = vmul.f32 %v398, 1.442695
    %v400 = vpow.pop %v399
    %v401 = vadd.f32 %v400, 1.0
    %v402 = vrcp.pop %v401
    %v403 = vmul.f32 1.0, %v402
    %v404 = vtanh.pop %v395
    %v405 = vmul.f32 %v403, %v238
    %407 = vrot.lane.b32.xlu0 %v404, 64
    %v408 = vpop.permute.xlu0 %407
    %v410 = vmul.f32 %v403, %v408
    %412 = vrot.lane.b32.xlu0 %v410, 32
    %v413 = vpop.permute.xlu0 %412
    %v415 = vadd.f32 %v405, %v413
    %v416 = vtanh.pop %v415
    %418 = vrot.lane.b32.xlu0 %v416, 64
    %v419 = vpop.permute.xlu0 %418
    %v421 = vmul.f32 %v403, %v419
    %s422 = scalar_lea.vmem %s0, 16
    %v423 = vld [vmem:[%s422] sm:$0xff]
    %424 = vset.pattern.permute.xlu0 0
    %425 = vperm.xlu0 %424, %v423
    %v426 = vpop.permute.xlu0 %425
    %vm427 = vcmp.eq.s32.totalorder %v426, %v63
    %v428 = vsel %vm427, 1, 0
    %v429 = vcvt.s32.f32 %v428
    %431 = vrot.lane.b32.xlu0 %v421, 32
    %v432 = vpop.permute.xlu0 %431
    %v433 = vsel %vm73, %v432, 0
    %435 = vmatprep.subr.mxu0 0.0
    %436 = vmatpush1.msra.mxu0 0.0
    %437 = vmatprep.subr.mxu0 0.0
    %438 = vmatpush1.msra.mxu0 0.0
    %439 = vmatprep.subr.mxu0 0.0
    %440 = vmatpush1.msra.mxu0 0.0
    %441 = vmatprep.subr.mxu0 0.0
    %442 = vmatpush1.msra.mxu0 0.0
    %443 = vmatprep.subr.mxu0 0.0
    %444 = vmatpush1.msra.mxu0 0.0
    %445 = vmatprep.subr.mxu0 0.0
    %446 = vmatpush1.msra.mxu0 0.0
    %447 = vmatprep.subr.mxu0 0.0
    %448 = vmatpush1.msra.mxu0 0.0
    %449 = vmatprep.subr.mxu0 0.0
    %450 = vmatpush1.msra.mxu0 0.0
    %451 = vmatprep.subr.mxu0 0.0
    %452 = vmatpush1.msra.mxu0 0.0
    %453 = vmatprep.subr.mxu0 0.0
    %454 = vmatpush1.msra.mxu0 0.0
    %455 = vmatprep.subr.mxu0 0.0
    %456 = vmatpush1.msra.mxu0 0.0
    %457 = vmatprep.subr.mxu0 0.0
    %458 = vmatpush1.msra.mxu0 0.0
    %459 = vmatprep.subr.mxu0 0.0
    %460 = vmatpush1.msra.mxu0 %v61
    %461 = vmatprep.subr.mxu0 0.0
    %462 = vmatpush1.msra.mxu0 %v60
    %463 = vmatprep.subr.mxu0 0.0
    %464 = vmatpush1.msra.mxu0 %v59
    %465 = vmatprep.subr.mxu0 0.0
    %466 = vmatpush1.msra.mxu0 %v58
    %467 = vmatprep.subr.mxu0 0.0
    %468 = vmatpush2.msra.mxu0 0.0
    %469 = vmatprep.subr.mxu0 0.0
    %470 = vmatpush2.msra.mxu0 0.0
    %471 = vmatprep.subr.mxu0 0.0
    %472 = vmatpush2.msra.mxu0 0.0
    %473 = vmatprep.subr.mxu0 0.0
    %474 = vmatpush2.msra.mxu0 0.0
    %475 = vmatprep.subr.mxu0 0.0
    %476 = vmatpush2.msra.mxu0 0.0
    %477 = vmatprep.subr.mxu0 0.0
    %478 = vmatpush2.msra.mxu0 0.0
    %479 = vmatprep.subr.mxu0 0.0
    %480 = vmatpush2.msra.mxu0 0.0
    %481 = vmatprep.subr.mxu0 0.0
    %482 = vmatpush2.msra.mxu0 0.0
    %483 = vmatprep.subr.mxu0 0.0
    %484 = vmatpush2.msra.mxu0 0.0
    %485 = vmatprep.subr.mxu0 0.0
    %486 = vmatpush2.msra.mxu0 0.0
    %487 = vmatprep.subr.mxu0 0.0
    %488 = vmatpush2.msra.mxu0 0.0
    %489 = vmatprep.subr.mxu0 0.0
    %490 = vmatpush2.msra.mxu0 0.0
    %491 = vmatprep.subr.mxu0 0.0
    %492 = vmatpush2.msra.mxu0 0.0
    %493 = vmatprep.subr.mxu0 0.0
    %494 = vmatpush2.msra.mxu0 0.0
    %495 = vmatprep.subr.mxu0 0.0
    %496 = vmatpush2.msra.mxu0 0.0
    %497 = vmatprep.subr.mxu0 0.0
    %498 = vmatpush2.msra.mxu0 0.0
    %499 = vmatprep.mubr.f32.mxu0 0.0
    %500 = vmatmul.mubr.f32.gmra.mxu0 %v433
    %v501 = vpop.f32.mrf.mxu0
    %v502 = vadd.f32 0.0, %v501
    %v503 = vpop.f32.mrf.mxu0
    %504 = vdwg.mxu0
    %505 = vmatprep.subr.mxu0 0.0
    %506 = vmatpush1.msra.mxu0 %v57
    %507 = vmatprep.subr.mxu0 0.0
    %508 = vmatpush1.msra.mxu0 %v56
    %509 = vmatprep.subr.mxu0 0.0
    %510 = vmatpush1.msra.mxu0 %v55
    %511 = vmatprep.subr.mxu0 0.0
    %512 = vmatpush1.msra.mxu0 %v54
    %513 = vmatprep.subr.mxu0 0.0
    %514 = vmatpush1.msra.mxu0 %v53
    %515 = vmatprep.subr.mxu0 0.0
    %516 = vmatpush1.msra.mxu0 %v52
    %517 = vmatprep.subr.mxu0 0.0
    %518 = vmatpush1.msra.mxu0 %v51
    %519 = vmatprep.subr.mxu0 0.0
    %520 = vmatpush1.msra.mxu0 %v50
    %521 = vmatprep.subr.mxu0 0.0
    %522 = vmatpush1.msra.mxu0 %v49
    %523 = vmatprep.subr.mxu0 0.0
    %524 = vmatpush1.msra.mxu0 %v48
    %525 = vmatprep.subr.mxu0 0.0
    %526 = vmatpush1.msra.mxu0 %v47
    %527 = vmatprep.subr.mxu0 0.0
    %528 = vmatpush1.msra.mxu0 %v46
    %529 = vmatprep.subr.mxu0 0.0
    %530 = vmatpush1.msra.mxu0 %v45
    %531 = vmatprep.subr.mxu0 0.0
    %532 = vmatpush1.msra.mxu0 %v44
    %533 = vmatprep.subr.mxu0 0.0
    %534 = vmatpush1.msra.mxu0 %v43
    %535 = vmatprep.subr.mxu0 0.0
    %536 = vmatpush1.msra.mxu0 %v42
    %537 = vmatprep.subr.mxu0 0.0
    %538 = vmatpush2.msra.mxu0 0.0
    %539 = vmatprep.subr.mxu0 0.0
    %540 = vmatpush2.msra.mxu0 0.0
    %541 = vmatprep.subr.mxu0 0.0
    %542 = vmatpush2.msra.mxu0 0.0
    %543 = vmatprep.subr.mxu0 0.0
    %544 = vmatpush2.msra.mxu0 0.0
    %545 = vmatprep.subr.mxu0 0.0
    %546 = vmatpush2.msra.mxu0 0.0
    %547 = vmatprep.subr.mxu0 0.0
    %548 = vmatpush2.msra.mxu0 0.0
    %549 = vmatprep.subr.mxu0 0.0
    %550 = vmatpush2.msra.mxu0 0.0
    %551 = vmatprep.subr.mxu0 0.0
    %552 = vmatpush2.msra.mxu0 0.0
    %553 = vmatprep.subr.mxu0 0.0
    %554 = vmatpush2.msra.mxu0 0.0
    %555 = vmatprep.subr.mxu0 0.0
    %556 = vmatpush2.msra.mxu0 0.0
    %557 = vmatprep.subr.mxu0 0.0
    %558 = vmatpush2.msra.mxu0 0.0
    %559 = vmatprep.subr.mxu0 0.0
    %560 = vmatpush2.msra.mxu0 0.0
    %561 = vmatprep.subr.mxu0 0.0
    %562 = vmatpush2.msra.mxu0 0.0
    %563 = vmatprep.subr.mxu0 0.0
    %564 = vmatpush2.msra.mxu0 0.0
    %565 = vmatprep.subr.mxu0 0.0
    %566 = vmatpush2.msra.mxu0 0.0
    %567 = vmatprep.subr.mxu0 0.0
    %568 = vmatpush2.msra.mxu0 0.0
    %569 = vmatprep.mubr.f32.mxu0 0.0
    %570 = vmatmul.mubr.f32.gmra.mxu0 %v429
    %v571 = vpop.f32.mrf.mxu0
    %v572 = vadd.f32 %v502, %v571
    %v573 = vpop.f32.mrf.mxu0
    %574 = vdwg.mxu0
    %v575 = vxor.u32 %v572, 2147483648
    %v576 = vmul.f32 %v575, 1.442695
    %v577 = vpow.pop %v576
    %v578 = vadd.f32 %v577, 1.0
    %v579 = vrcp.pop %v578
    %v580 = vmul.f32 1.0, %v579
    %v581 = vtanh.pop %v572
    %v582 = vmul.f32 %v580, %v415
    %584 = vrot.lane.b32.xlu0 %v581, 64
    %v585 = vpop.permute.xlu0 %584
    %v587 = vmul.f32 %v580, %v585
    %589 = vrot.lane.b32.xlu0 %v587, 32
    %v590 = vpop.permute.xlu0 %589
    %v592 = vadd.f32 %v582, %v590
    %v593 = vtanh.pop %v592
    %595 = vrot.lane.b32.xlu0 %v593, 64
    %v596 = vpop.permute.xlu0 %595
    %v598 = vmul.f32 %v580, %v596
    %s599 = scalar_lea.vmem %s0, 24
    %v600 = vld [vmem:[%s599] sm:$0xff]
    %601 = vset.pattern.permute.xlu0 0
    %602 = vperm.xlu0 %601, %v600
    %v603 = vpop.permute.xlu0 %602
    %vm604 = vcmp.eq.s32.totalorder %v603, %v63
    %v605 = vsel %vm604, 1, 0
    %v606 = vcvt.s32.f32 %v605
    %608 = vrot.lane.b32.xlu0 %v598, 32
    %v609 = vpop.permute.xlu0 %608
    %v610 = vsel %vm73, %v609, 0
    %612 = vmatprep.subr.mxu0 0.0
    %613 = vmatpush1.msra.mxu0 0.0
    %614 = vmatprep.subr.mxu0 0.0
    %615 = vmatpush1.msra.mxu0 0.0
    %616 = vmatprep.subr.mxu0 0.0
    %617 = vmatpush1.msra.mxu0 0.0
    %618 = vmatprep.subr.mxu0 0.0
    %619 = vmatpush1.msra.mxu0 0.0
    %620 = vmatprep.subr.mxu0 0.0
    %621 = vmatpush1.msra.mxu0 0.0
    %622 = vmatprep.subr.mxu0 0.0
    %623 = vmatpush1.msra.mxu0 0.0
    %624 = vmatprep.subr.mxu0 0.0
    %625 = vmatpush1.msra.mxu0 0.0
    %626 = vmatprep.subr.mxu0 0.0
    %627 = vmatpush1.msra.mxu0 0.0
    %628 = vmatprep.subr.mxu0 0.0
    %629 = vmatpush1.msra.mxu0 0.0
    %630 = vmatprep.subr.mxu0 0.0
    %631 = vmatpush1.msra.mxu0 0.0
    %632 = vmatprep.subr.mxu0 0.0
    %633 = vmatpush1.msra.mxu0 0.0
    %634 = vmatprep.subr.mxu0 0.0
    %635 = vmatpush1.msra.mxu0 0.0
    %636 = vmatprep.subr.mxu0 0.0
    %637 = vmatpush1.msra.mxu0 %v61
    %638 = vmatprep.subr.mxu0 0.0
    %639 = vmatpush1.msra.mxu0 %v60
    %640 = vmatprep.subr.mxu0 0.0
    %641 = vmatpush1.msra.mxu0 %v59
    %642 = vmatprep.subr.mxu0 0.0
    %643 = vmatpush1.msra.mxu0 %v58
    %644 = vmatprep.subr.mxu0 0.0
    %645 = vmatpush2.msra.mxu0 0.0
    %646 = vmatprep.subr.mxu0 0.0
    %647 = vmatpush2.msra.mxu0 0.0
    %648 = vmatprep.subr.mxu0 0.0
    %649 = vmatpush2.msra.mxu0 0.0
    %650 = vmatprep.subr.mxu0 0.0
    %651 = vmatpush2.msra.mxu0 0.0
    %652 = vmatprep.subr.mxu0 0.0
    %653 = vmatpush2.msra.mxu0 0.0
    %654 = vmatprep.subr.mxu0 0.0
    %655 = vmatpush2.msra.mxu0 0.0
    %656 = vmatprep.subr.mxu0 0.0
    %657 = vmatpush2.msra.mxu0 0.0
    %658 = vmatprep.subr.mxu0 0.0
    %659 = vmatpush2.msra.mxu0 0.0
    %660 = vmatprep.subr.mxu0 0.0
    %661 = vmatpush2.msra.mxu0 0.0
    %662 = vmatprep.subr.mxu0 0.0
    %663 = vmatpush2.msra.mxu0 0.0
    %664 = vmatprep.subr.mxu0 0.0
    %665 = vmatpush2.msra.mxu0 0.0
    %666 = vmatprep.subr.mxu0 0.0
    %667 = vmatpush2.msra.mxu0 0.0
    %668 = vmatprep.subr.mxu0 0.0
    %669 = vmatpush2.msra.mxu0 0.0
    %670 = vmatprep.subr.mxu0 0.0
    %671 = vmatpush2.msra.mxu0 0.0
    %672 = vmatprep.subr.mxu0 0.0
    %673 = vmatpush2.msra.mxu0 0.0
    %674 = vmatprep.subr.mxu0 0.0
    %675 = vmatpush2.msra.mxu0 0.0
    %676 = vmatprep.mubr.f32.mxu0 0.0
    %677 = vmatmul.mubr.f32.gmra.mxu0 %v610
    %v678 = vpop.f32.mrf.mxu0
    %v679 = vadd.f32 0.0, %v678
    %v680 = vpop.f32.mrf.mxu0
    %681 = vdwg.mxu0
    %682 = vmatprep.subr.mxu0 0.0
    %683 = vmatpush1.msra.mxu0 %v57
    %684 = vmatprep.subr.mxu0 0.0
    %685 = vmatpush1.msra.mxu0 %v56
    %686 = vmatprep.subr.mxu0 0.0
    %687 = vmatpush1.msra.mxu0 %v55
    %688 = vmatprep.subr.mxu0 0.0
    %689 = vmatpush1.msra.mxu0 %v54
    %690 = vmatprep.subr.mxu0 0.0
    %691 = vmatpush1.msra.mxu0 %v53
    %692 = vmatprep.subr.mxu0 0.0
    %693 = vmatpush1.msra.mxu0 %v52
    %694 = vmatprep.subr.mxu0 0.0
    %695 = vmatpush1.msra.mxu0 %v51
    %696 = vmatprep.subr.mxu0 0.0
    %697 = vmatpush1.msra.mxu0 %v50
    %698 = vmatprep.subr.mxu0 0.0
    %699 = vmatpush1.msra.mxu0 %v49
    %700 = vmatprep.subr.mxu0 0.0
    %701 = vmatpush1.msra.mxu0 %v48
    %702 = vmatprep.subr.mxu0 0.0
    %703 = vmatpush1.msra.mxu0 %v47
    %704 = vmatprep.subr.mxu0 0.0
    %705 = vmatpush1.msra.mxu0 %v46
    %706 = vmatprep.subr.mxu0 0.0
    %707 = vmatpush1.msra.mxu0 %v45
    %708 = vmatprep.subr.mxu0 0.0
    %709 = vmatpush1.msra.mxu0 %v44
    %710 = vmatprep.subr.mxu0 0.0
    %711 = vmatpush1.msra.mxu0 %v43
    %712 = vmatprep.subr.mxu0 0.0
    %713 = vmatpush1.msra.mxu0 %v42
    %714 = vmatprep.subr.mxu0 0.0
    %715 = vmatpush2.msra.mxu0 0.0
    %716 = vmatprep.subr.mxu0 0.0
    %717 = vmatpush2.msra.mxu0 0.0
    %718 = vmatprep.subr.mxu0 0.0
    %719 = vmatpush2.msra.mxu0 0.0
    %720 = vmatprep.subr.mxu0 0.0
    %721 = vmatpush2.msra.mxu0 0.0
    %722 = vmatprep.subr.mxu0 0.0
    %723 = vmatpush2.msra.mxu0 0.0
    %724 = vmatprep.subr.mxu0 0.0
    %725 = vmatpush2.msra.mxu0 0.0
    %726 = vmatprep.subr.mxu0 0.0
    %727 = vmatpush2.msra.mxu0 0.0
    %728 = vmatprep.subr.mxu0 0.0
    %729 = vmatpush2.msra.mxu0 0.0
    %730 = vmatprep.subr.mxu0 0.0
    %731 = vmatpush2.msra.mxu0 0.0
    %732 = vmatprep.subr.mxu0 0.0
    %733 = vmatpush2.msra.mxu0 0.0
    %734 = vmatprep.subr.mxu0 0.0
    %735 = vmatpush2.msra.mxu0 0.0
    %736 = vmatprep.subr.mxu0 0.0
    %737 = vmatpush2.msra.mxu0 0.0
    %738 = vmatprep.subr.mxu0 0.0
    %739 = vmatpush2.msra.mxu0 0.0
    %740 = vmatprep.subr.mxu0 0.0
    %741 = vmatpush2.msra.mxu0 0.0
    %742 = vmatprep.subr.mxu0 0.0
    %743 = vmatpush2.msra.mxu0 0.0
    %744 = vmatprep.subr.mxu0 0.0
    %745 = vmatpush2.msra.mxu0 0.0
    %746 = vmatprep.mubr.f32.mxu0 0.0
    %747 = vmatmul.mubr.f32.gmra.mxu0 %v606
    %v748 = vpop.f32.mrf.mxu0
    %v749 = vadd.f32 %v679, %v748
    %v750 = vpop.f32.mrf.mxu0
    %751 = vdwg.mxu0
    %v752 = vxor.u32 %v749, 2147483648
    %v753 = vmul.f32 %v752, 1.442695
    %v754 = vpow.pop %v753
    %v755 = vadd.f32 %v754, 1.0
    %v756 = vrcp.pop %v755
    %v757 = vmul.f32 1.0, %v756
    %v758 = vtanh.pop %v749
    %v759 = vmul.f32 %v757, %v592
    %761 = vrot.lane.b32.xlu0 %v758, 64
    %v762 = vpop.permute.xlu0 %761
    %v764 = vmul.f32 %v757, %v762
    %766 = vrot.lane.b32.xlu0 %v764, 32
    %v767 = vpop.permute.xlu0 %766
    %v769 = vadd.f32 %v759, %v767
    %v770 = vtanh.pop %v769
    %772 = vrot.lane.b32.xlu0 %v770, 64
    %v773 = vpop.permute.xlu0 %772
    %v775 = vmul.f32 %v757, %v773
    %s776 = scalar_lea.vmem %s0, 32
    %v777 = vld [vmem:[%s776] sm:$0xff]
    %778 = vset.pattern.permute.xlu0 0
    %779 = vperm.xlu0 %778, %v777
    %v780 = vpop.permute.xlu0 %779
    %vm781 = vcmp.eq.s32.totalorder %v780, %v63
    %v782 = vsel %vm781, 1, 0
    %v783 = vcvt.s32.f32 %v782
    %785 = vrot.lane.b32.xlu0 %v775, 32
    %v786 = vpop.permute.xlu0 %785
    %v787 = vsel %vm73, %v786, 0
    %789 = vmatprep.subr.mxu0 0.0
    %790 = vmatpush1.msra.mxu0 0.0
    %791 = vmatprep.subr.mxu0 0.0
    %792 = vmatpush1.msra.mxu0 0.0
    %793 = vmatprep.subr.mxu0 0.0
    %794 = vmatpush1.msra.mxu0 0.0
    %795 = vmatprep.subr.mxu0 0.0
    %796 = vmatpush1.msra.mxu0 0.0
    %797 = vmatprep.subr.mxu0 0.0
    %798 = vmatpush1.msra.mxu0 0.0
    %799 = vmatprep.subr.mxu0 0.0
    %800 = vmatpush1.msra.mxu0 0.0
    %801 = vmatprep.subr.mxu0 0.0
    %802 = vmatpush1.msra.mxu0 0.0
    %803 = vmatprep.subr.mxu0 0.0
    %804 = vmatpush1.msra.mxu0 0.0
    %805 = vmatprep.subr.mxu0 0.0
    %806 = vmatpush1.msra.mxu0 0.0
    %807 = vmatprep.subr.mxu0 0.0
    %808 = vmatpush1.msra.mxu0 0.0
    %809 = vmatprep.subr.mxu0 0.0
    %810 = vmatpush1.msra.mxu0 0.0
    %811 = vmatprep.subr.mxu0 0.0
    %812 = vmatpush1.msra.mxu0 0.0
    %813 = vmatprep.subr.mxu0 0.0
    %814 = vmatpush1.msra.mxu0 %v61
    %815 = vmatprep.subr.mxu0 0.0
    %816 = vmatpush1.msra.mxu0 %v60
    %817 = vmatprep.subr.mxu0 0.0
    %818 = vmatpush1.msra.mxu0 %v59
    %819 = vmatprep.subr.mxu0 0.0
    %820 = vmatpush1.msra.mxu0 %v58
    %821 = vmatprep.subr.mxu0 0.0
    %822 = vmatpush2.msra.mxu0 0.0
    %823 = vmatprep.subr.mxu0 0.0
    %824 = vmatpush2.msra.mxu0 0.0
    %825 = vmatprep.subr.mxu0 0.0
    %826 = vmatpush2.msra.mxu0 0.0
    %827 = vmatprep.subr.mxu0 0.0
    %828 = vmatpush2.msra.mxu0 0.0
    %829 = vmatprep.subr.mxu0 0.0
    %830 = vmatpush2.msra.mxu0 0.0
    %831 = vmatprep.subr.mxu0 0.0
    %832 = vmatpush2.msra.mxu0 0.0
    %833 = vmatprep.subr.mxu0 0.0
    %834 = vmatpush2.msra.mxu0 0.0
    %835 = vmatprep.subr.mxu0 0.0
    %836 = vmatpush2.msra.mxu0 0.0
    %837 = vmatprep.subr.mxu0 0.0
    %838 = vmatpush2.msra.mxu0 0.0
    %839 = vmatprep.subr.mxu0 0.0
    %840 = vmatpush2.msra.mxu0 0.0
    %841 = vmatprep.subr.mxu0 0.0
    %842 = vmatpush2.msra.mxu0 0.0
    %843 = vmatprep.subr.mxu0 0.0
    %844 = vmatpush2.msra.mxu0 0.0
    %845 = vmatprep.subr.mxu0 0.0
    %846 = vmatpush2.msra.mxu0 0.0
    %847 = vmatprep.subr.mxu0 0.0
    %848 = vmatpush2.msra.mxu0 0.0
    %849 = vmatprep.subr.mxu0 0.0
    %850 = vmatpush2.msra.mxu0 0.0
    %851 = vmatprep.subr.mxu0 0.0
    %852 = vmatpush2.msra.mxu0 0.0
    %853 = vmatprep.mubr.f32.mxu0 0.0
    %854 = vmatmul.mubr.f32.gmra.mxu0 %v787
    %v855 = vpop.f32.mrf.mxu0
    %v856 = vadd.f32 0.0, %v855
    %v857 = vpop.f32.mrf.mxu0
    %858 = vdwg.mxu0
    %859 = vmatprep.subr.mxu0 0.0
    %860 = vmatpush1.msra.mxu0 %v57
    %861 = vmatprep.subr.mxu0 0.0
    %862 = vmatpush1.msra.mxu0 %v56
    %863 = vmatprep.subr.mxu0 0.0
    %864 = vmatpush1.msra.mxu0 %v55
    %865 = vmatprep.subr.mxu0 0.0
    %866 = vmatpush1.msra.mxu0 %v54
    %867 = vmatprep.subr.mxu0 0.0
    %868 = vmatpush1.msra.mxu0 %v53
    %869 = vmatprep.subr.mxu0 0.0
    %870 = vmatpush1.msra.mxu0 %v52
    %871 = vmatprep.subr.mxu0 0.0
    %872 = vmatpush1.msra.mxu0 %v51
    %873 = vmatprep.subr.mxu0 0.0
    %874 = vmatpush1.msra.mxu0 %v50
    %875 = vmatprep.subr.mxu0 0.0
    %876 = vmatpush1.msra.mxu0 %v49
    %877 = vmatprep.subr.mxu0 0.0
    %878 = vmatpush1.msra.mxu0 %v48
    %879 = vmatprep.subr.mxu0 0.0
    %880 = vmatpush1.msra.mxu0 %v47
    %881 = vmatprep.subr.mxu0 0.0
    %882 = vmatpush1.msra.mxu0 %v46
    %883 = vmatprep.subr.mxu0 0.0
    %884 = vmatpush1.msra.mxu0 %v45
    %885 = vmatprep.subr.mxu0 0.0
    %886 = vmatpush1.msra.mxu0 %v44
    %887 = vmatprep.subr.mxu0 0.0
    %888 = vmatpush1.msra.mxu0 %v43
    %889 = vmatprep.subr.mxu0 0.0
    %890 = vmatpush1.msra.mxu0 %v42
    %891 = vmatprep.subr.mxu0 0.0
    %892 = vmatpush2.msra.mxu0 0.0
    %893 = vmatprep.subr.mxu0 0.0
    %894 = vmatpush2.msra.mxu0 0.0
    %895 = vmatprep.subr.mxu0 0.0
    %896 = vmatpush2.msra.mxu0 0.0
    %897 = vmatprep.subr.mxu0 0.0
    %898 = vmatpush2.msra.mxu0 0.0
    %899 = vmatprep.subr.mxu0 0.0
    %900 = vmatpush2.msra.mxu0 0.0
    %901 = vmatprep.subr.mxu0 0.0
    %902 = vmatpush2.msra.mxu0 0.0
    %903 = vmatprep.subr.mxu0 0.0
    %904 = vmatpush2.msra.mxu0 0.0
    %905 = vmatprep.subr.mxu0 0.0
    %906 = vmatpush2.msra.mxu0 0.0
    %907 = vmatprep.subr.mxu0 0.0
    %908 = vmatpush2.msra.mxu0 0.0
    %909 = vmatprep.subr.mxu0 0.0
    %910 = vmatpush2.msra.mxu0 0.0
    %911 = vmatprep.subr.mxu0 0.0
    %912 = vmatpush2.msra.mxu0 0.0
    %913 = vmatprep.subr.mxu0 0.0
    %914 = vmatpush2.msra.mxu0 0.0
    %915 = vmatprep.subr.mxu0 0.0
    %916 = vmatpush2.msra.mxu0 0.0
    %917 = vmatprep.subr.mxu0 0.0
    %918 = vmatpush2.msra.mxu0 0.0
    %919 = vmatprep.subr.mxu0 0.0
    %920 = vmatpush2.msra.mxu0 0.0
    %921 = vmatprep.subr.mxu0 0.0
    %922 = vmatpush2.msra.mxu0 0.0
    %923 = vmatprep.mubr.f32.mxu0 0.0
    %924 = vmatmul.mubr.f32.gmra.mxu0 %v783
    %v925 = vpop.f32.mrf.mxu0
    %v926 = vadd.f32 %v856, %v925
    %v927 = vpop.f32.mrf.mxu0
    %928 = vdwg.mxu0
    %v929 = vxor.u32 %v926, 2147483648
    %v930 = vmul.f32 %v929, 1.442695
    %v931 = vpow.pop %v930
    %v932 = vadd.f32 %v931, 1.0
    %v933 = vrcp.pop %v932
    %v934 = vmul.f32 1.0, %v933
    %v935 = vtanh.pop %v926
    %v936 = vmul.f32 %v934, %v769
    %938 = vrot.lane.b32.xlu0 %v935, 64
    %v939 = vpop.permute.xlu0 %938
    %v941 = vmul.f32 %v934, %v939
    %943 = vrot.lane.b32.xlu0 %v941, 32
    %v944 = vpop.permute.xlu0 %943
    %v946 = vadd.f32 %v936, %v944
    %v947 = vtanh.pop %v946
    %949 = vrot.lane.b32.xlu0 %v947, 64
    %v950 = vpop.permute.xlu0 %949
    %v952 = vmul.f32 %v934, %v950
    %s953 = scalar_lea.vmem %s0, 40
    %v954 = vld [vmem:[%s953] sm:$0xff]
    %955 = vset.pattern.permute.xlu0 0
    %956 = vperm.xlu0 %955, %v954
    %v957 = vpop.permute.xlu0 %956
    %vm958 = vcmp.eq.s32.totalorder %v957, %v63
    %v959 = vsel %vm958, 1, 0
    %v960 = vcvt.s32.f32 %v959
    %962 = vrot.lane.b32.xlu0 %v952, 32
    %v963 = vpop.permute.xlu0 %962
    %v964 = vsel %vm73, %v963, 0
    %966 = vmatprep.subr.mxu0 0.0
    %967 = vmatpush1.msra.mxu0 0.0
    %968 = vmatprep.subr.mxu0 0.0
    %969 = vmatpush1.msra.mxu0 0.0
    %970 = vmatprep.subr.mxu0 0.0
    %971 = vmatpush1.msra.mxu0 0.0
    %972 = vmatprep.subr.mxu0 0.0
    %973 = vmatpush1.msra.mxu0 0.0
    %974 = vmatprep.subr.mxu0 0.0
    %975 = vmatpush1.msra.mxu0 0.0
    %976 = vmatprep.subr.mxu0 0.0
    %977 = vmatpush1.msra.mxu0 0.0
    %978 = vmatprep.subr.mxu0 0.0
    %979 = vmatpush1.msra.mxu0 0.0
    %980 = vmatprep.subr.mxu0 0.0
    %981 = vmatpush1.msra.mxu0 0.0
    %982 = vmatprep.subr.mxu0 0.0
    %983 = vmatpush1.msra.mxu0 0.0
    %984 = vmatprep.subr.mxu0 0.0
    %985 = vmatpush1.msra.mxu0 0.0
    %986 = vmatprep.subr.mxu0 0.0
    %987 = vmatpush1.msra.mxu0 0.0
    %988 = vmatprep.subr.mxu0 0.0
    %989 = vmatpush1.msra.mxu0 0.0
    %990 = vmatprep.subr.mxu0 0.0
    %991 = vmatpush1.msra.mxu0 %v61
    %992 = vmatprep.subr.mxu0 0.0
    %993 = vmatpush1.msra.mxu0 %v60
    %994 = vmatprep.subr.mxu0 0.0
    %995 = vmatpush1.msra.mxu0 %v59
    %996 = vmatprep.subr.mxu0 0.0
    %997 = vmatpush1.msra.mxu0 %v58
    %998 = vmatprep.subr.mxu0 0.0
    %999 = vmatpush2.msra.mxu0 0.0
    %1000 = vmatprep.subr.mxu0 0.0
    %1001 = vmatpush2.msra.mxu0 0.0
    %1002 = vmatprep.subr.mxu0 0.0
    %1003 = vmatpush2.msra.mxu0 0.0
    %1004 = vmatprep.subr.mxu0 0.0
    %1005 = vmatpush2.msra.mxu0 0.0
    %1006 = vmatprep.subr.mxu0 0.0
    %1007 = vmatpush2.msra.mxu0 0.0
    %1008 = vmatprep.subr.mxu0 0.0
    %1009 = vmatpush2.msra.mxu0 0.0
    %1010 = vmatprep.subr.mxu0 0.0
    %1011 = vmatpush2.msra.mxu0 0.0
    %1012 = vmatprep.subr.mxu0 0.0
    %1013 = vmatpush2.msra.mxu0 0.0
    %1014 = vmatprep.subr.mxu0 0.0
    %1015 = vmatpush2.msra.mxu0 0.0
    %1016 = vmatprep.subr.mxu0 0.0
    %1017 = vmatpush2.msra.mxu0 0.0
    %1018 = vmatprep.subr.mxu0 0.0
    %1019 = vmatpush2.msra.mxu0 0.0
    %1020 = vmatprep.subr.mxu0 0.0
    %1021 = vmatpush2.msra.mxu0 0.0
    %1022 = vmatprep.subr.mxu0 0.0
    %1023 = vmatpush2.msra.mxu0 0.0
    %1024 = vmatprep.subr.mxu0 0.0
    %1025 = vmatpush2.msra.mxu0 0.0
    %1026 = vmatprep.subr.mxu0 0.0
    %1027 = vmatpush2.msra.mxu0 0.0
    %1028 = vmatprep.subr.mxu0 0.0
    %1029 = vmatpush2.msra.mxu0 0.0
    %1030 = vmatprep.mubr.f32.mxu0 0.0
    %1031 = vmatmul.mubr.f32.gmra.mxu0 %v964
    %v1032 = vpop.f32.mrf.mxu0
    %v1033 = vadd.f32 0.0, %v1032
    %v1034 = vpop.f32.mrf.mxu0
    %1035 = vdwg.mxu0
    %1036 = vmatprep.subr.mxu0 0.0
    %1037 = vmatpush1.msra.mxu0 %v57
    %1038 = vmatprep.subr.mxu0 0.0
    %1039 = vmatpush1.msra.mxu0 %v56
    %1040 = vmatprep.subr.mxu0 0.0
    %1041 = vmatpush1.msra.mxu0 %v55
    %1042 = vmatprep.subr.mxu0 0.0
    %1043 = vmatpush1.msra.mxu0 %v54
    %1044 = vmatprep.subr.mxu0 0.0
    %1045 = vmatpush1.msra.mxu0 %v53
    %1046 = vmatprep.subr.mxu0 0.0
    %1047 = vmatpush1.msra.mxu0 %v52
    %1048 = vmatprep.subr.mxu0 0.0
    %1049 = vmatpush1.msra.mxu0 %v51
    %1050 = vmatprep.subr.mxu0 0.0
    %1051 = vmatpush1.msra.mxu0 %v50
    %1052 = vmatprep.subr.mxu0 0.0
    %1053 = vmatpush1.msra.mxu0 %v49
    %1054 = vmatprep.subr.mxu0 0.0
    %1055 = vmatpush1.msra.mxu0 %v48
    %1056 = vmatprep.subr.mxu0 0.0
    %1057 = vmatpush1.msra.mxu0 %v47
    %1058 = vmatprep.subr.mxu0 0.0
    %1059 = vmatpush1.msra.mxu0 %v46
    %1060 = vmatprep.subr.mxu0 0.0
    %1061 = vmatpush1.msra.mxu0 %v45
    %1062 = vmatprep.subr.mxu0 0.0
    %1063 = vmatpush1.msra.mxu0 %v44
    %1064 = vmatprep.subr.mxu0 0.0
    %1065 = vmatpush1.msra.mxu0 %v43
    %1066 = vmatprep.subr.mxu0 0.0
    %1067 = vmatpush1.msra.mxu0 %v42
    %1068 = vmatprep.subr.mxu0 0.0
    %1069 = vmatpush2.msra.mxu0 0.0
    %1070 = vmatprep.subr.mxu0 0.0
    %1071 = vmatpush2.msra.mxu0 0.0
    %1072 = vmatprep.subr.mxu0 0.0
    %1073 = vmatpush2.msra.mxu0 0.0
    %1074 = vmatprep.subr.mxu0 0.0
    %1075 = vmatpush2.msra.mxu0 0.0
    %1076 = vmatprep.subr.mxu0 0.0
    %1077 = vmatpush2.msra.mxu0 0.0
    %1078 = vmatprep.subr.mxu0 0.0
    %1079 = vmatpush2.msra.mxu0 0.0
    %1080 = vmatprep.subr.mxu0 0.0
    %1081 = vmatpush2.msra.mxu0 0.0
    %1082 = vmatprep.subr.mxu0 0.0
    %1083 = vmatpush2.msra.mxu0 0.0
    %1084 = vmatprep.subr.mxu0 0.0
    %1085 = vmatpush2.msra.mxu0 0.0
    %1086 = vmatprep.subr.mxu0 0.0
    %1087 = vmatpush2.msra.mxu0 0.0
    %1088 = vmatprep.subr.mxu0 0.0
    %1089 = vmatpush2.msra.mxu0 0.0
    %1090 = vmatprep.subr.mxu0 0.0
    %1091 = vmatpush2.msra.mxu0 0.0
    %1092 = vmatprep.subr.mxu0 0.0
    %1093 = vmatpush2.msra.mxu0 0.0
    %1094 = vmatprep.subr.mxu0 0.0
    %1095 = vmatpush2.msra.mxu0 0.0
    %1096 = vmatprep.subr.mxu0 0.0
    %1097 = vmatpush2.msra.mxu0 0.0
    %1098 = vmatprep.subr.mxu0 0.0
    %1099 = vmatpush2.msra.mxu0 0.0
    %1100 = vmatprep.mubr.f32.mxu0 0.0
    %1101 = vmatmul.mubr.f32.gmra.mxu0 %v960
    %v1102 = vpop.f32.mrf.mxu0
    %v1103 = vadd.f32 %v1033, %v1102
    %v1104 = vpop.f32.mrf.mxu0
    %1105 = vdwg.mxu0
    %v1106 = vxor.u32 %v1103, 2147483648
    %v1107 = vmul.f32 %v1106, 1.442695
    %v1108 = vpow.pop %v1107
    %v1109 = vadd.f32 %v1108, 1.0
    %v1110 = vrcp.pop %v1109
    %v1111 = vmul.f32 1.0, %v1110
    %v1112 = vtanh.pop %v1103
    %v1113 = vmul.f32 %v1111, %v946
    %1115 = vrot.lane.b32.xlu0 %v1112, 64
    %v1116 = vpop.permute.xlu0 %1115
    %v1118 = vmul.f32 %v1111, %v1116
    %1120 = vrot.lane.b32.xlu0 %v1118, 32
    %v1121 = vpop.permute.xlu0 %1120
    %v1123 = vadd.f32 %v1113, %v1121
    %v1124 = vtanh.pop %v1123
    %1126 = vrot.lane.b32.xlu0 %v1124, 64
    %v1127 = vpop.permute.xlu0 %1126
    %v1129 = vmul.f32 %v1111, %v1127
    %s1130 = scalar_lea.vmem %s0, 48
    %v1131 = vld [vmem:[%s1130] sm:$0xff]
    %1132 = vset.pattern.permute.xlu0 0
    %1133 = vperm.xlu0 %1132, %v1131
    %v1134 = vpop.permute.xlu0 %1133
    %vm1135 = vcmp.eq.s32.totalorder %v1134, %v63
    %v1136 = vsel %vm1135, 1, 0
    %v1137 = vcvt.s32.f32 %v1136
    %1139 = vrot.lane.b32.xlu0 %v1129, 32
    %v1140 = vpop.permute.xlu0 %1139
    %v1141 = vsel %vm73, %v1140, 0
    %1143 = vmatprep.subr.mxu0 0.0
    %1144 = vmatpush1.msra.mxu0 0.0
    %1145 = vmatprep.subr.mxu0 0.0
    %1146 = vmatpush1.msra.mxu0 0.0
    %1147 = vmatprep.subr.mxu0 0.0
    %1148 = vmatpush1.msra.mxu0 0.0
    %1149 = vmatprep.subr.mxu0 0.0
    %1150 = vmatpush1.msra.mxu0 0.0
    %1151 = vmatprep.subr.mxu0 0.0
    %1152 = vmatpush1.msra.mxu0 0.0
    %1153 = vmatprep.subr.mxu0 0.0
    %1154 = vmatpush1.msra.mxu0 0.0
    %1155 = vmatprep.subr.mxu0 0.0
    %1156 = vmatpush1.msra.mxu0 0.0
    %1157 = vmatprep.subr.mxu0 0.0
    %1158 = vmatpush1.msra.mxu0 0.0
    %1159 = vmatprep.subr.mxu0 0.0
    %1160 = vmatpush1.msra.mxu0 0.0
    %1161 = vmatprep.subr.mxu0 0.0
    %1162 = vmatpush1.msra.mxu0 0.0
    %1163 = vmatprep.subr.mxu0 0.0
    %1164 = vmatpush1.msra.mxu0 0.0
    %1165 = vmatprep.subr.mxu0 0.0
    %1166 = vmatpush1.msra.mxu0 0.0
    %1167 = vmatprep.subr.mxu0 0.0
    %1168 = vmatpush1.msra.mxu0 %v61
    %1169 = vmatprep.subr.mxu0 0.0
    %1170 = vmatpush1.msra.mxu0 %v60
    %1171 = vmatprep.subr.mxu0 0.0
    %1172 = vmatpush1.msra.mxu0 %v59
    %1173 = vmatprep.subr.mxu0 0.0
    %1174 = vmatpush1.msra.mxu0 %v58
    %1175 = vmatprep.subr.mxu0 0.0
    %1176 = vmatpush2.msra.mxu0 0.0
    %1177 = vmatprep.subr.mxu0 0.0
    %1178 = vmatpush2.msra.mxu0 0.0
    %1179 = vmatprep.subr.mxu0 0.0
    %1180 = vmatpush2.msra.mxu0 0.0
    %1181 = vmatprep.subr.mxu0 0.0
    %1182 = vmatpush2.msra.mxu0 0.0
    %1183 = vmatprep.subr.mxu0 0.0
    %1184 = vmatpush2.msra.mxu0 0.0
    %1185 = vmatprep.subr.mxu0 0.0
    %1186 = vmatpush2.msra.mxu0 0.0
    %1187 = vmatprep.subr.mxu0 0.0
    %1188 = vmatpush2.msra.mxu0 0.0
    %1189 = vmatprep.subr.mxu0 0.0
    %1190 = vmatpush2.msra.mxu0 0.0
    %1191 = vmatprep.subr.mxu0 0.0
    %1192 = vmatpush2.msra.mxu0 0.0
    %1193 = vmatprep.subr.mxu0 0.0
    %1194 = vmatpush2.msra.mxu0 0.0
    %1195 = vmatprep.subr.mxu0 0.0
    %1196 = vmatpush2.msra.mxu0 0.0
    %1197 = vmatprep.subr.mxu0 0.0
    %1198 = vmatpush2.msra.mxu0 0.0
    %1199 = vmatprep.subr.mxu0 0.0
    %1200 = vmatpush2.msra.mxu0 0.0
    %1201 = vmatprep.subr.mxu0 0.0
    %1202 = vmatpush2.msra.mxu0 0.0
    %1203 = vmatprep.subr.mxu0 0.0
    %1204 = vmatpush2.msra.mxu0 0.0
    %1205 = vmatprep.subr.mxu0 0.0
    %1206 = vmatpush2.msra.mxu0 0.0
    %1207 = vmatprep.mubr.f32.mxu0 0.0
    %1208 = vmatmul.mubr.f32.gmra.mxu0 %v1141
    %v1209 = vpop.f32.mrf.mxu0
    %v1210 = vadd.f32 0.0, %v1209
    %v1211 = vpop.f32.mrf.mxu0
    %1212 = vdwg.mxu0
    %1213 = vmatprep.subr.mxu0 0.0
    %1214 = vmatpush1.msra.mxu0 %v57
    %1215 = vmatprep.subr.mxu0 0.0
    %1216 = vmatpush1.msra.mxu0 %v56
    %1217 = vmatprep.subr.mxu0 0.0
    %1218 = vmatpush1.msra.mxu0 %v55
    %1219 = vmatprep.subr.mxu0 0.0
    %1220 = vmatpush1.msra.mxu0 %v54
    %1221 = vmatprep.subr.mxu0 0.0
    %1222 = vmatpush1.msra.mxu0 %v53
    %1223 = vmatprep.subr.mxu0 0.0
    %1224 = vmatpush1.msra.mxu0 %v52
    %1225 = vmatprep.subr.mxu0 0.0
    %1226 = vmatpush1.msra.mxu0 %v51
    %1227 = vmatprep.subr.mxu0 0.0
    %1228 = vmatpush1.msra.mxu0 %v50
    %1229 = vmatprep.subr.mxu0 0.0
    %1230 = vmatpush1.msra.mxu0 %v49
    %1231 = vmatprep.subr.mxu0 0.0
    %1232 = vmatpush1.msra.mxu0 %v48
    %1233 = vmatprep.subr.mxu0 0.0
    %1234 = vmatpush1.msra.mxu0 %v47
    %1235 = vmatprep.subr.mxu0 0.0
    %1236 = vmatpush1.msra.mxu0 %v46
    %1237 = vmatprep.subr.mxu0 0.0
    %1238 = vmatpush1.msra.mxu0 %v45
    %1239 = vmatprep.subr.mxu0 0.0
    %1240 = vmatpush1.msra.mxu0 %v44
    %1241 = vmatprep.subr.mxu0 0.0
    %1242 = vmatpush1.msra.mxu0 %v43
    %1243 = vmatprep.subr.mxu0 0.0
    %1244 = vmatpush1.msra.mxu0 %v42
    %1245 = vmatprep.subr.mxu0 0.0
    %1246 = vmatpush2.msra.mxu0 0.0
    %1247 = vmatprep.subr.mxu0 0.0
    %1248 = vmatpush2.msra.mxu0 0.0
    %1249 = vmatprep.subr.mxu0 0.0
    %1250 = vmatpush2.msra.mxu0 0.0
    %1251 = vmatprep.subr.mxu0 0.0
    %1252 = vmatpush2.msra.mxu0 0.0
    %1253 = vmatprep.subr.mxu0 0.0
    %1254 = vmatpush2.msra.mxu0 0.0
    %1255 = vmatprep.subr.mxu0 0.0
    %1256 = vmatpush2.msra.mxu0 0.0
    %1257 = vmatprep.subr.mxu0 0.0
    %1258 = vmatpush2.msra.mxu0 0.0
    %1259 = vmatprep.subr.mxu0 0.0
    %1260 = vmatpush2.msra.mxu0 0.0
    %1261 = vmatprep.subr.mxu0 0.0
    %1262 = vmatpush2.msra.mxu0 0.0
    %1263 = vmatprep.subr.mxu0 0.0
    %1264 = vmatpush2.msra.mxu0 0.0
    %1265 = vmatprep.subr.mxu0 0.0
    %1266 = vmatpush2.msra.mxu0 0.0
    %1267 = vmatprep.subr.mxu0 0.0
    %1268 = vmatpush2.msra.mxu0 0.0
    %1269 = vmatprep.subr.mxu0 0.0
    %1270 = vmatpush2.msra.mxu0 0.0
    %1271 = vmatprep.subr.mxu0 0.0
    %1272 = vmatpush2.msra.mxu0 0.0
    %1273 = vmatprep.subr.mxu0 0.0
    %1274 = vmatpush2.msra.mxu0 0.0
    %1275 = vmatprep.subr.mxu0 0.0
    %1276 = vmatpush2.msra.mxu0 0.0
    %1277 = vmatprep.mubr.f32.mxu0 0.0
    %1278 = vmatmul.mubr.f32.gmra.mxu0 %v1137
    %v1279 = vpop.f32.mrf.mxu0
    %v1280 = vadd.f32 %v1210, %v1279
    %v1281 = vpop.f32.mrf.mxu0
    %1282 = vdwg.mxu0
    %v1283 = vxor.u32 %v1280, 2147483648
    %v1284 = vmul.f32 %v1283, 1.442695
    %v1285 = vpow.pop %v1284
    %v1286 = vadd.f32 %v1285, 1.0
    %v1287 = vrcp.pop %v1286
    %v1288 = vmul.f32 1.0, %v1287
    %v1289 = vtanh.pop %v1280
    %v1290 = vmul.f32 %v1288, %v1123
    %1292 = vrot.lane.b32.xlu0 %v1289, 64
    %v1293 = vpop.permute.xlu0 %1292
    %v1295 = vmul.f32 %v1288, %v1293
    %1297 = vrot.lane.b32.xlu0 %v1295, 32
    %v1298 = vpop.permute.xlu0 %1297
    %v1300 = vadd.f32 %v1290, %v1298
    %v1301 = vtanh.pop %v1300
    %1303 = vrot.lane.b32.xlu0 %v1301, 64
    %v1304 = vpop.permute.xlu0 %1303
    %v1306 = vmul.f32 %v1288, %v1304
    %s1307 = scalar_lea.vmem %s0, 56
    %v1308 = vld [vmem:[%s1307] sm:$0xff]
    %1309 = vset.pattern.permute.xlu0 0
    %1310 = vperm.xlu0 %1309, %v1308
    %v1311 = vpop.permute.xlu0 %1310
    %vm1312 = vcmp.eq.s32.totalorder %v1311, %v63
    %v1313 = vsel %vm1312, 1, 0
    %v1314 = vcvt.s32.f32 %v1313
    %1316 = vrot.lane.b32.xlu0 %v1306, 32
    %v1317 = vpop.permute.xlu0 %1316
    %v1318 = vsel %vm73, %v1317, 0
    %1320 = vmatprep.subr.mxu0 0.0
    %1321 = vmatpush1.msra.mxu0 0.0
    %1322 = vmatprep.subr.mxu0 0.0
    %1323 = vmatpush1.msra.mxu0 0.0
    %1324 = vmatprep.subr.mxu0 0.0
    %1325 = vmatpush1.msra.mxu0 0.0
    %1326 = vmatprep.subr.mxu0 0.0
    %1327 = vmatpush1.msra.mxu0 0.0
    %1328 = vmatprep.subr.mxu0 0.0
    %1329 = vmatpush1.msra.mxu0 0.0
    %1330 = vmatprep.subr.mxu0 0.0
    %1331 = vmatpush1.msra.mxu0 0.0
    %1332 = vmatprep.subr.mxu0 0.0
    %1333 = vmatpush1.msra.mxu0 0.0
    %1334 = vmatprep.subr.mxu0 0.0
    %1335 = vmatpush1.msra.mxu0 0.0
    %1336 = vmatprep.subr.mxu0 0.0
    %1337 = vmatpush1.msra.mxu0 0.0
    %1338 = vmatprep.subr.mxu0 0.0
    %1339 = vmatpush1.msra.mxu0 0.0
    %1340 = vmatprep.subr.mxu0 0.0
    %1341 = vmatpush1.msra.mxu0 0.0
    %1342 = vmatprep.subr.mxu0 0.0
    %1343 = vmatpush1.msra.mxu0 0.0
    %1344 = vmatprep.subr.mxu0 0.0
    %1345 = vmatpush1.msra.mxu0 %v61
    %1346 = vmatprep.subr.mxu0 0.0
    %1347 = vmatpush1.msra.mxu0 %v60
    %1348 = vmatprep.subr.mxu0 0.0
    %1349 = vmatpush1.msra.mxu0 %v59
    %1350 = vmatprep.subr.mxu0 0.0
    %1351 = vmatpush1.msra.mxu0 %v58
    %1352 = vmatprep.subr.mxu0 0.0
    %1353 = vmatpush2.msra.mxu0 0.0
    %1354 = vmatprep.subr.mxu0 0.0
    %1355 = vmatpush2.msra.mxu0 0.0
    %1356 = vmatprep.subr.mxu0 0.0
    %1357 = vmatpush2.msra.mxu0 0.0
    %1358 = vmatprep.subr.mxu0 0.0
    %1359 = vmatpush2.msra.mxu0 0.0
    %1360 = vmatprep.subr.mxu0 0.0
    %1361 = vmatpush2.msra.mxu0 0.0
    %1362 = vmatprep.subr.mxu0 0.0
    %1363 = vmatpush2.msra.mxu0 0.0
    %1364 = vmatprep.subr.mxu0 0.0
    %1365 = vmatpush2.msra.mxu0 0.0
    %1366 = vmatprep.subr.mxu0 0.0
    %1367 = vmatpush2.msra.mxu0 0.0
    %1368 = vmatprep.subr.mxu0 0.0
    %1369 = vmatpush2.msra.mxu0 0.0
    %1370 = vmatprep.subr.mxu0 0.0
    %1371 = vmatpush2.msra.mxu0 0.0
    %1372 = vmatprep.subr.mxu0 0.0
    %1373 = vmatpush2.msra.mxu0 0.0
    %1374 = vmatprep.subr.mxu0 0.0
    %1375 = vmatpush2.msra.mxu0 0.0
    %1376 = vmatprep.subr.mxu0 0.0
    %1377 = vmatpush2.msra.mxu0 0.0
    %1378 = vmatprep.subr.mxu0 0.0
    %1379 = vmatpush2.msra.mxu0 0.0
    %1380 = vmatprep.subr.mxu0 0.0
    %1381 = vmatpush2.msra.mxu0 0.0
    %1382 = vmatprep.subr.mxu0 0.0
    %1383 = vmatpush2.msra.mxu0 0.0
    %1384 = vmatprep.mubr.f32.mxu0 0.0
    %1385 = vmatmul.mubr.f32.gmra.mxu0 %v1318
    %v1386 = vpop.f32.mrf.mxu0
    %v1387 = vadd.f32 0.0, %v1386
    %v1388 = vpop.f32.mrf.mxu0
    %1389 = vdwg.mxu0
    %1390 = vmatprep.subr.mxu0 0.0
    %1391 = vmatpush1.msra.mxu0 %v57
    %1392 = vmatprep.subr.mxu0 0.0
    %1393 = vmatpush1.msra.mxu0 %v56
    %1394 = vmatprep.subr.mxu0 0.0
    %1395 = vmatpush1.msra.mxu0 %v55
    %1396 = vmatprep.subr.mxu0 0.0
    %1397 = vmatpush1.msra.mxu0 %v54
    %1398 = vmatprep.subr.mxu0 0.0
    %1399 = vmatpush1.msra.mxu0 %v53
    %1400 = vmatprep.subr.mxu0 0.0
    %1401 = vmatpush1.msra.mxu0 %v52
    %1402 = vmatprep.subr.mxu0 0.0
    %1403 = vmatpush1.msra.mxu0 %v51
    %1404 = vmatprep.subr.mxu0 0.0
    %1405 = vmatpush1.msra.mxu0 %v50
    %1406 = vmatprep.subr.mxu0 0.0
    %1407 = vmatpush1.msra.mxu0 %v49
    %1408 = vmatprep.subr.mxu0 0.0
    %1409 = vmatpush1.msra.mxu0 %v48
    %1410 = vmatprep.subr.mxu0 0.0
    %1411 = vmatpush1.msra.mxu0 %v47
    %1412 = vmatprep.subr.mxu0 0.0
    %1413 = vmatpush1.msra.mxu0 %v46
    %1414 = vmatprep.subr.mxu0 0.0
    %1415 = vmatpush1.msra.mxu0 %v45
    %1416 = vmatprep.subr.mxu0 0.0
    %1417 = vmatpush1.msra.mxu0 %v44
    %1418 = vmatprep.subr.mxu0 0.0
    %1419 = vmatpush1.msra.mxu0 %v43
    %1420 = vmatprep.subr.mxu0 0.0
    %1421 = vmatpush1.msra.mxu0 %v42
    %1422 = vmatprep.subr.mxu0 0.0
    %1423 = vmatpush2.msra.mxu0 0.0
    %1424 = vmatprep.subr.mxu0 0.0
    %1425 = vmatpush2.msra.mxu0 0.0
    %1426 = vmatprep.subr.mxu0 0.0
    %1427 = vmatpush2.msra.mxu0 0.0
    %1428 = vmatprep.subr.mxu0 0.0
    %1429 = vmatpush2.msra.mxu0 0.0
    %1430 = vmatprep.subr.mxu0 0.0
    %1431 = vmatpush2.msra.mxu0 0.0
    %1432 = vmatprep.subr.mxu0 0.0
    %1433 = vmatpush2.msra.mxu0 0.0
    %1434 = vmatprep.subr.mxu0 0.0
    %1435 = vmatpush2.msra.mxu0 0.0
    %1436 = vmatprep.subr.mxu0 0.0
    %1437 = vmatpush2.msra.mxu0 0.0
    %1438 = vmatprep.subr.mxu0 0.0
    %1439 = vmatpush2.msra.mxu0 0.0
    %1440 = vmatprep.subr.mxu0 0.0
    %1441 = vmatpush2.msra.mxu0 0.0
    %1442 = vmatprep.subr.mxu0 0.0
    %1443 = vmatpush2.msra.mxu0 0.0
    %1444 = vmatprep.subr.mxu0 0.0
    %1445 = vmatpush2.msra.mxu0 0.0
    %1446 = vmatprep.subr.mxu0 0.0
    %1447 = vmatpush2.msra.mxu0 0.0
    %1448 = vmatprep.subr.mxu0 0.0
    %1449 = vmatpush2.msra.mxu0 0.0
    %1450 = vmatprep.subr.mxu0 0.0
    %1451 = vmatpush2.msra.mxu0 0.0
    %1452 = vmatprep.subr.mxu0 0.0
    %1453 = vmatpush2.msra.mxu0 0.0
    %1454 = vmatprep.mubr.f32.mxu0 0.0
    %1455 = vmatmul.mubr.f32.gmra.mxu0 %v1314
    %v1456 = vpop.f32.mrf.mxu0
    %v1457 = vadd.f32 %v1387, %v1456
    %v1458 = vpop.f32.mrf.mxu0
    %1459 = vdwg.mxu0
    %v1460 = vxor.u32 %v1457, 2147483648
    %v1461 = vmul.f32 %v1460, 1.442695
    %v1462 = vpow.pop %v1461
    %v1463 = vadd.f32 %v1462, 1.0
    %v1464 = vrcp.pop %v1463
    %v1465 = vmul.f32 1.0, %v1464
    %v1466 = vtanh.pop %v1457
    %v1467 = vmul.f32 %v1465, %v1300
    %1469 = vrot.lane.b32.xlu0 %v1466, 64
    %v1470 = vpop.permute.xlu0 %1469
    %v1472 = vmul.f32 %v1465, %v1470
    %1474 = vrot.lane.b32.xlu0 %v1472, 32
    %v1475 = vpop.permute.xlu0 %1474
    %v1477 = vadd.f32 %v1467, %v1475
    %v1478 = vtanh.pop %v1477
    %1480 = vrot.lane.b32.xlu0 %v1478, 64
    %v1481 = vpop.permute.xlu0 %1480
    %v1483 = vmul.f32 %v1465, %v1481
    %1485 = vrot.lane.b32.xlu0 %v1483, 32
    %v1486 = vpop.permute.xlu0 %1485
    %1488 = vst.msk [vmem:[#allocation2] sm:$0xff] %vm73, %v1486
    %1490 = vrot.lane.b32.xlu0 %v1477, 96
    %v1491 = vpop.permute.xlu0 %1490
    %1493 = vst.msk [vmem:[#allocation3] sm:$0xff] %vm73, %v1491
    // Predicated region
    $region30: #{tpu_custom_call.1} parent=1 // pred_check
      %p1494 = pneg %p35
    $region31: #{tpu_custom_call.1} parent=1 // pred_check_branch
      %1496 = sbr.rel (%p1494) target = $region33
    $region32: #{tpu_custom_call.1} parent=1 // pred_region
      %v1497 = vld [vmem:[%s3] sm:$0xff]
      %v1498 = vld [vmem:[%s3 + $0x8] sm:$0xff]
      %v1499 = vld [vmem:[%s3 + $0x10] sm:$0xff]
      %v1500 = vld [vmem:[%s3 + $0x18] sm:$0xff]
      %v1501 = vld [vmem:[%s4] sm:$0x1]
      %v1503 = vlaneseq
      %v1504 = vshrl.u32 %v1503, 7
      %v1505 = vsub.s32 0, %v1504
      %v1506 = vrot.slane %v1501, %v1505
      %v1508 = vsel %vm73, %v1486, 0
      %1510 = vmatprep.subr.mxu0 0.0
      %1511 = vmatpush1.msra.mxu0 0.0
      %1512 = vmatprep.subr.mxu0 0.0
      %1513 = vmatpush1.msra.mxu0 0.0
      %1514 = vmatprep.subr.mxu0 0.0
      %1515 = vmatpush1.msra.mxu0 0.0
      %1516 = vmatprep.subr.mxu0 0.0
      %1517 = vmatpush1.msra.mxu0 0.0
      %1518 = vmatprep.subr.mxu0 0.0
      %1519 = vmatpush1.msra.mxu0 0.0
      %1520 = vmatprep.subr.mxu0 0.0
      %1521 = vmatpush1.msra.mxu0 0.0
      %1522 = vmatprep.subr.mxu0 0.0
      %1523 = vmatpush1.msra.mxu0 0.0
      %1524 = vmatprep.subr.mxu0 0.0
      %1525 = vmatpush1.msra.mxu0 0.0
      %1526 = vmatprep.subr.mxu0 0.0
      %1527 = vmatpush1.msra.mxu0 0.0
      %1528 = vmatprep.subr.mxu0 0.0
      %1529 = vmatpush1.msra.mxu0 0.0
      %1530 = vmatprep.subr.mxu0 0.0
      %1531 = vmatpush1.msra.mxu0 0.0
      %1532 = vmatprep.subr.mxu0 0.0
      %1533 = vmatpush1.msra.mxu0 0.0
      %1534 = vmatprep.subr.mxu0 0.0
      %1535 = vmatpush1.msra.mxu0 %v1500
      %1536 = vmatprep.subr.mxu0 0.0
      %1537 = vmatpush1.msra.mxu0 %v1499
      %1538 = vmatprep.subr.mxu0 0.0
      %1539 = vmatpush1.msra.mxu0 %v1498
      %1540 = vmatprep.subr.mxu0 0.0
      %1541 = vmatpush1.msra.mxu0 %v1497
      %1542 = vmatprep.subr.mxu0 0.0
      %1543 = vmatpush2.msra.mxu0 0.0
      %1544 = vmatprep.subr.mxu0 0.0
      %1545 = vmatpush2.msra.mxu0 0.0
      %1546 = vmatprep.subr.mxu0 0.0
      %1547 = vmatpush2.msra.mxu0 0.0
      %1548 = vmatprep.subr.mxu0 0.0
      %1549 = vmatpush2.msra.mxu0 0.0
      %1550 = vmatprep.subr.mxu0 0.0
      %1551 = vmatpush2.msra.mxu0 0.0
      %1552 = vmatprep.subr.mxu0 0.0
      %1553 = vmatpush2.msra.mxu0 0.0
      %1554 = vmatprep.subr.mxu0 0.0
      %1555 = vmatpush2.msra.mxu0 0.0
      %1556 = vmatprep.subr.mxu0 0.0
      %1557 = vmatpush2.msra.mxu0 0.0
      %1558 = vmatprep.subr.mxu0 0.0
      %1559 = vmatpush2.msra.mxu0 0.0
      %1560 = vmatprep.subr.mxu0 0.0
      %1561 = vmatpush2.msra.mxu0 0.0
      %1562 = vmatprep.subr.mxu0 0.0
      %1563 = vmatpush2.msra.mxu0 0.0
      %1564 = vmatprep.subr.mxu0 0.0
      %1565 = vmatpush2.msra.mxu0 0.0
      %1566 = vmatprep.subr.mxu0 0.0
      %1567 = vmatpush2.msra.mxu0 0.0
      %1568 = vmatprep.subr.mxu0 0.0
      %1569 = vmatpush2.msra.mxu0 0.0
      %1570 = vmatprep.subr.mxu0 0.0
      %1571 = vmatpush2.msra.mxu0 0.0
      %1572 = vmatprep.subr.mxu0 0.0
      %1573 = vmatpush2.msra.mxu0 0.0
      %1574 = vmatprep.mubr.f32.mxu0 0.0
      %1575 = vmatmul.mubr.f32.gmra.mxu0 %v1508
      %v1576 = vpop.f32.mrf.mxu0
      %v1577 = vadd.f32 %v1506, %v1576
      %v1578 = vpop.f32.mrf.mxu0
      %1579 = vdwg.mxu0
      %1580 = vst [vmem:[#allocation7] sm:$0xff] %v1577
    $region33: #{tpu_custom_call.1} parent=1 // pred_fallthru
      _
    // Predicated region
    $region34: #{tpu_custom_call.1} parent=1 // pred_check
      _
    $region35: #{tpu_custom_call.1} parent=1 // pred_check_branch
      %1582 = sbr.rel (0) target = $region37
    $region36: #{tpu_custom_call.1} parent=1 // pred_region
      %s1584 = ssub.s32 128, 128
      %1585 = vsyncadd [#allocation6], %s1584
      %s1587 = sshll.u32 [#allocation7], 4
      %s1588 = int_to_ptr.vmem [resolvable:$true] %s1587
      %1590 = dma.vmem_to_hbm [thread:$0]  %s1588, 128, %s5, [#allocation6]
    $region37: #{tpu_custom_call.1} parent=1 // pred_fallthru
      _
    // Predicated region
    $region38: #{tpu_custom_call.1} parent=1 // pred_check
      _
    $region39: #{tpu_custom_call.1} parent=1 // pred_check_branch
      %1592 = sbr.rel (0) target = $region41
    $region40: #{tpu_custom_call.1} parent=1 // pred_region
      %1593 = dma.done [#allocation6], 128
    $region41: #{tpu_custom_call.1} parent=1 // pred_fallthru
      _
    %1594 = vsyncpa [#allocation5], 1
    %1595 = vsyncpa [#allocation6], 1

</llo_original>
